<compile_context>
chip_gen: v7x
topology: tpu7x:2x2x1
jax: 0.10.0
libtpu: 0.0.40
codegen_flags: <defaults>
</compile_context>

<pallas_src>
import functools

import jax
import jax.numpy as jnp
from jax.experimental import pallas as pl
from jax.experimental.pallas import tpu as pltpu


def _vmem_limit_bytes():
    """Pick a scoped-VMEM limit from the physical capacity, with headroom."""
    try:
        cap = pltpu.get_tpu_info().vmem_capacity_bytes
    except Exception:
        cap = 64 * 1024 * 1024          # conservative fallback (v7x-sized)
    return min(int(cap) * 3 // 4, 96 * 1024 * 1024)


_VMEM_LIMIT = _vmem_limit_bytes()
_BIG_VMEM = _VMEM_LIMIT > 64 * 1024 * 1024      # True on 128 MiB generations (v5e/v6e)

# Larger tiles on v5e/v6e (128 MiB VMEM), moderate tiles on v7x (64 MiB).
_TM_TARGET = 512 if _BIG_VMEM else 256
_TN_TARGET = 1024 if _BIG_VMEM else 512


def _pick_tile(dim, target):
    """Largest divisor of `dim` that is <= target (dims here are multiples of 128)."""
    t = min(dim, target)
    while dim % t != 0:
        t //= 2
    return max(t, 1)


# ---------------------------------------------------------------------------
# Kernel 1: fused LayerNorm1 + qkv projection.
# LN is recomputed per output-column tile (cheap vs. the matmul) so BOTH grid
# axes can be marked "parallel" (v7x megacore).  Output is bf16 — it is only
# ever consumed as an MXU operand in the attention kernel.
# ---------------------------------------------------------------------------
def _ln_matmul_kernel(x_ref, g_ref, be_ref, w_ref, b_ref, o_ref, *, eps):
    xv = x_ref[...].astype(jnp.float32)                        # (tm, K)
    mean = jnp.mean(xv, axis=-1, keepdims=True)
    xc = xv - mean
    var = jnp.mean(xc * xc, axis=-1, keepdims=True)
    xn = (xc * jax.lax.rsqrt(var + eps) * g_ref[...] + be_ref[...]).astype(jnp.bfloat16)
    y = jnp.dot(xn, w_ref[...], preferred_element_type=jnp.float32) + b_ref[...]
    o_ref[...] = y.astype(o_ref.dtype)


def ln_matmul(x, ln_g, ln_b, w_bf16, b_f32, eps=1e-5):
    """y = LayerNorm(x) @ w + b, emitted in bf16.  x:(M,K) f32, w:(K,Nout) bf16."""
    M, K = x.shape
    _, Nout = w_bf16.shape
    tm = _pick_tile(M, _TM_TARGET)
    tn = _pick_tile(Nout, _TN_TARGET)
    assert (tm % 8 == 0 or tm == M) and (tn % 128 == 0 or tn == Nout), "bad tile"
    return pl.pallas_call(
        functools.partial(_ln_matmul_kernel, eps=eps),
        out_shape=jax.ShapeDtypeStruct((M, Nout), jnp.bfloat16),
        grid=(M // tm, Nout // tn),
        in_specs=[
            pl.BlockSpec((tm, K), lambda i, j: (i, 0)),
            pl.BlockSpec((1, K), lambda i, j: (0, 0)),
            pl.BlockSpec((1, K), lambda i, j: (0, 0)),
            pl.BlockSpec((K, tn), lambda i, j: (0, j)),
            pl.BlockSpec((1, tn), lambda i, j: (0, j)),
        ],
        out_specs=pl.BlockSpec((tm, tn), lambda i, j: (i, j)),
        compiler_params=pltpu.CompilerParams(
            dimension_semantics=("parallel", "parallel"),
            vmem_limit_bytes=_VMEM_LIMIT),
    )(x, ln_g, ln_b, w_bf16, b_f32)


# ---------------------------------------------------------------------------
# Kernel 2: flash attention + output projection + residual add, all fused.
# qkv (B, N, 3C) bf16 is passed three times with BlockSpecs selecting the q/k/v
# column third so every DMA slab is lane-dense (.., tile, C).  Online softmax
# over kv tiles; q is already bf16 with `scale` folded into the qkv weights so
# there is no per-step mul/cast.  The epilogue applies the proj matmul per head
# ((tq,D) @ (D,C) accumulated into a (tq,C) f32 value), adds proj bias + the
# residual and stores one lane-dense (tq, C) block — no concatenate, no extra
# (M, C) HBM round-trip, no separate proj kernel.
# ---------------------------------------------------------------------------
def _attn_proj_kernel(q_ref, k_ref, v_ref, r_ref, pw_ref, pb_ref, o_ref,
                      m_sc, l_sc, acc_sc, *, num_heads):
    kv = pl.program_id(2)

    @pl.when(kv == 0)
    def _():
        m_sc[...] = jnp.full(m_sc.shape, -jnp.inf, m_sc.dtype)
        l_sc[...] = jnp.zeros(l_sc.shape, l_sc.dtype)
        acc_sc[...] = jnp.zeros(acc_sc.shape, acc_sc.dtype)

    C = q_ref.shape[-1]
    D = C // num_heads
    q_all = q_ref[0]                           # (tq, C) bf16, pre-scaled
    k_all = k_ref[0]                           # (tk, C) bf16
    v_all = v_ref[0]                           # (tk, C) bf16

    for h in range(num_heads):                 # static unroll over heads
        sl = slice(h * D, (h + 1) * D)
        # s = q_h @ k_h^T without materializing the transpose
        s = jax.lax.dot_general(q_all[:, sl], k_all[:, sl],
                                (((1,), (1,)), ((), ())),
                                preferred_element_type=jnp.float32)      # (tq, tk)
        m_prev = m_sc[h]                                                 # (tq, 1)
        m_new = jnp.maximum(m_prev, s.max(axis=-1, keepdims=True))
        alpha = jnp.exp(m_prev - m_new)
        p = jnp.exp(s - m_new)
        l_sc[h] = alpha * l_sc[h] + p.sum(axis=-1, keepdims=True)
        acc_sc[h] = alpha * acc_sc[h] + jnp.dot(
            p.astype(jnp.bfloat16), v_all[:, sl],
            preferred_element_type=jnp.float32)                          # (tq, D)
        m_sc[h] = m_new

    @pl.when(kv == pl.num_programs(2) - 1)
    def _():
        # Fused: out = softmax(qk) @ v @ proj_w + proj_b + residual
        out = r_ref[0].astype(jnp.float32) + pb_ref[...]                 # (tq, C)
        for h in range(num_heads):
            sl = slice(h * D, (h + 1) * D)
            inv_l = pl.reciprocal(l_sc[h], approx=False)                 # once per q tile
            oh = (acc_sc[h] * inv_l).astype(jnp.bfloat16)                # (tq, D)
            out = out + jnp.dot(oh, pw_ref[sl, :],
                                preferred_element_type=jnp.float32)
        o_ref[0] = out.astype(o_ref.dtype)


def attention_proj(qkv, x_res, proj_w_bf16, proj_b_f32, num_heads,
                   tq_target=256, tk_target=512):
    """out = x_res + (softmax(q k^T) v) @ proj_w + proj_b.  qkv:(B,N,3C) bf16."""
    B, N, C3 = qkv.shape
    C = C3 // 3
    D = C // num_heads
    tq = _pick_tile(N, tq_target)
    tk = _pick_tile(N, tk_target)
    assert tq % 8 == 0 or tq == N, "bad q tile"
    q_spec = pl.BlockSpec((1, tq, C), lambda b, i, j: (b, i, 0))
    k_spec = pl.BlockSpec((1, tk, C), lambda b, i, j: (b, j, 1))
    v_spec = pl.BlockSpec((1, tk, C), lambda b, i, j: (b, j, 2))
    r_spec = pl.BlockSpec((1, tq, C), lambda b, i, j: (b, i, 0))
    pw_spec = pl.BlockSpec((C, C), lambda b, i, j: (0, 0))
    pb_spec = pl.BlockSpec((1, C), lambda b, i, j: (0, 0))
    o_spec = pl.BlockSpec((1, tq, C), lambda b, i, j: (b, i, 0))
    return pl.pallas_call(
        functools.partial(_attn_proj_kernel, num_heads=num_heads),
        out_shape=jax.ShapeDtypeStruct((B, N, C), jnp.float32),
        grid=(B, N // tq, N // tk),
        in_specs=[q_spec, k_spec, v_spec, r_spec, pw_spec, pb_spec],
        out_specs=o_spec,
        scratch_shapes=[
            pltpu.VMEM((num_heads, tq, 1), jnp.float32),   # running max
            pltpu.VMEM((num_heads, tq, 1), jnp.float32),   # running denom
            pltpu.VMEM((num_heads, tq, D), jnp.float32),   # output accumulator
        ],
        compiler_params=pltpu.CompilerParams(
            dimension_semantics=("parallel", "parallel", "arbitrary"),
            vmem_limit_bytes=_VMEM_LIMIT),
    )(qkv, qkv, qkv, x_res, proj_w_bf16, proj_b_f32)


# ---------------------------------------------------------------------------
# Kernel 3: fused LayerNorm2 + fc1 + exact GELU + fc2 + residual add.
# The hidden (M, 4C) activation never leaves VMEM: for each row tile, the fc2
# partial products are accumulated in a resident (tm, C) f32 scratch across the
# hidden-dim tiles (grid axis j, "arbitrary"); bias + residual + store at last j.
# ---------------------------------------------------------------------------
def _ln_mlp_kernel(x_ref, g_ref, be_ref, w1_ref, b1_ref, w2_ref, b2_ref, o_ref,
                   xn_sc, acc_sc, *, eps):
    j = pl.program_id(1)

    @pl.when(j == 0)
    def _():
        xv = x_ref[...].astype(jnp.float32)                    # (tm, C)
        mean = jnp.mean(xv, axis=-1, keepdims=True)
        xc = xv - mean
        var = jnp.mean(xc * xc, axis=-1, keepdims=True)
        xn_sc[...] = (xc * jax.lax.rsqrt(var + eps) * g_ref[...]
                      + be_ref[...]).astype(jnp.bfloat16)
        acc_sc[...] = jnp.zeros_like(acc_sc)

    h = jnp.dot(xn_sc[...], w1_ref[...],
                preferred_element_type=jnp.float32) + b1_ref[...]        # (tm, tn)
    # exact (erf) GELU, matching torch.nn.GELU default
    h = 0.5 * h * (1.0 + jax.lax.erf(h * 0.7071067811865476))
    acc_sc[...] += jnp.dot(h.astype(jnp.bfloat16), w2_ref[...],
                           preferred_element_type=jnp.float32)           # (tm, C)

    @pl.when(j == pl.num_programs(1) - 1)
    def _():
        o_ref[...] = (acc_sc[...] + b2_ref[...]
                      + x_ref[...].astype(jnp.float32)).astype(o_ref.dtype)


def ln_mlp(x, ln_g, ln_b, w1_bf16, b1_f32, w2_bf16, b2_f32, eps=1e-5):
    """y = x + GELU(LayerNorm(x) @ w1 + b1) @ w2 + b2.  x:(M,C) f32."""
    M, C = x.shape
    _, H = w1_bf16.shape
    tm = _pick_tile(M, _TM_TARGET)
    tn = _pick_tile(H, _TN_TARGET)
    assert (tm % 8 == 0 or tm == M) and (tn % 128 == 0 or tn == H), "bad tile"
    return pl.pallas_call(
        functools.partial(_ln_mlp_kernel, eps=eps),
        out_shape=jax.ShapeDtypeStruct((M, C), jnp.float32),
        grid=(M // tm, H // tn),
        in_specs=[
            pl.BlockSpec((tm, C), lambda i, j: (i, 0)),
            pl.BlockSpec((1, C), lambda i, j: (0, 0)),
            pl.BlockSpec((1, C), lambda i, j: (0, 0)),
            pl.BlockSpec((C, tn), lambda i, j: (0, j)),
            pl.BlockSpec((1, tn), lambda i, j: (0, j)),
            pl.BlockSpec((tn, C), lambda i, j: (j, 0)),
            pl.BlockSpec((1, C), lambda i, j: (0, 0)),
        ],
        out_specs=pl.BlockSpec((tm, C), lambda i, j: (i, 0)),
        scratch_shapes=[
            pltpu.VMEM((tm, C), jnp.bfloat16),   # cached LayerNorm(x) tile
            pltpu.VMEM((tm, C), jnp.float32),    # fc2 accumulator
        ],
        compiler_params=pltpu.CompilerParams(
            dimension_semantics=("parallel", "arbitrary"),
            vmem_limit_bytes=_VMEM_LIMIT),
    )(x, ln_g, ln_b, w1_bf16, b1_f32, w2_bf16, b2_f32)


# ---------------------------------------------------------------------------
# Parameter preparation: one-time bf16 weight cast + bias reshapes + folding
# the attention `scale` into the q columns of the qkv projection.
# ---------------------------------------------------------------------------
def prepare_params(params, num_heads, C):
    D = C // num_heads
    scale = D ** (-0.5)
    qkv_w = params["qkv_w"].astype(jnp.float32)
    qkv_b = params["qkv_b"].astype(jnp.float32)
    qkv_w = qkv_w.at[:, :C].multiply(scale)        # fold q *= scale into the weights
    qkv_b = qkv_b.at[:C].multiply(scale)
    H = params["fc1_w"].shape[1]
    return {
        "ln1_g": params["ln1_g"].reshape(1, C).astype(jnp.float32),
        "ln1_b": params["ln1_b"].reshape(1, C).astype(jnp.float32),
        "qkv_w": qkv_w.astype(jnp.bfloat16),
        "qkv_b": qkv_b.reshape(1, 3 * C),
        "proj_w": params["proj_w"].astype(jnp.bfloat16),
        "proj_b": params["proj_b"].reshape(1, C).astype(jnp.float32),
        "ln2_g": params["ln2_g"].reshape(1, C).astype(jnp.float32),
        "ln2_b": params["ln2_b"].reshape(1, C).astype(jnp.float32),
        "fc1_w": params["fc1_w"].astype(jnp.bfloat16),
        "fc1_b": params["fc1_b"].reshape(1, H).astype(jnp.float32),
        "fc2_w": params["fc2_w"].astype(jnp.bfloat16),
        "fc2_b": params["fc2_b"].reshape(1, C).astype(jnp.float32),
    }


# ---------------------------------------------------------------------------
# RPEBlock forward (3 fused pallas_calls)
# ---------------------------------------------------------------------------
def rpe_block_forward(x, prepped, num_heads):
    B, N, C = x.shape
    M = B * N
    x2 = x.reshape(M, C)

    # ---- x = x + proj(attn(norm1(x))) ----
    qkv = ln_matmul(x2, prepped["ln1_g"], prepped["ln1_b"],
                    prepped["qkv_w"], prepped["qkv_b"])                  # (M, 3C) bf16
    # TODO(synk): rpe_q / rpe_k / rpe_v terms omitted -- build_rpe(rpe_config=None) yields None.
    x_attn = attention_proj(qkv.reshape(B, N, 3 * C), x,
                            prepped["proj_w"], prepped["proj_b"],
                            num_heads)                                   # (B, N, C) f32

    # ---- x = x + fc2(gelu(fc1(norm2(x)))) ----
    out = ln_mlp(x_attn.reshape(M, C), prepped["ln2_g"], prepped["ln2_b"],
                 prepped["fc1_w"], prepped["fc1_b"],
                 prepped["fc2_w"], prepped["fc2_b"])                     # (M, C) f32

    return out.reshape(B, N, C)


# ---------------------------------------------------------------------------
# Pure-JAX reference (sanity check)
# ---------------------------------------------------------------------------
def _ref_forward(x, params, num_heads):
    B, N, C = x.shape
    D = C // num_heads
    scale = D ** (-0.5)

    def ln(v, g, b):
        m = jnp.mean(v, axis=-1, keepdims=True)
        s = jnp.mean((v - m) ** 2, axis=-1, keepdims=True)
        return (v - m) * jax.lax.rsqrt(s + 1e-5) * g + b

    def lin(v, w, b):
        return jnp.dot(v, w, precision=jax.lax.Precision.HIGHEST) + b

    h = ln(x, params["ln1_g"], params["ln1_b"])
    qkv = lin(h, params["qkv_w"], params["qkv_b"]).reshape(B, N, 3, num_heads, D)
    qkv = qkv.transpose(2, 0, 3, 1, 4)
    q, k, v = qkv[0] * scale, qkv[1], qkv[2]
    attn = jnp.einsum("bhqd,bhkd->bhqk", q, k, precision=jax.lax.Precision.HIGHEST)
    attn = jax.nn.softmax(attn, axis=-1)
    o = jnp.einsum("bhqk,bhkd->bhqd", attn, v, precision=jax.lax.Precision.HIGHEST)
    o = o.transpose(0, 2, 1, 3).reshape(B, N, C)
    x = x + lin(o, params["proj_w"], params["proj_b"])
    h2 = ln(x, params["ln2_g"], params["ln2_b"])
    f = lin(h2, params["fc1_w"], params["fc1_b"])
    f = 0.5 * f * (1.0 + jax.lax.erf(f * 0.7071067811865476))
    f = lin(f, params["fc2_w"], params["fc2_b"])
    return x + f


# ---------------------------------------------------------------------------
# Main
# ---------------------------------------------------------------------------
if __name__ == "__main__":
    # Small but TPU-tile-friendly shapes (multiples of 8 / 128).
    B, N, C = 2, 128, 256
    num_heads = 4
    mlp_ratio = 4.0
    H_mlp = int(C * mlp_ratio)

    key = jax.random.PRNGKey(0)
    keys = jax.random.split(key, 8)

    params = {
        # LayerNorms (torch defaults: weight=1, bias=0)
        "ln1_g": jnp.ones((C,), jnp.float32),
        "ln1_b": jnp.zeros((C,), jnp.float32),
        "ln2_g": jnp.ones((C,), jnp.float32),
        "ln2_b": jnp.zeros((C,), jnp.float32),
        # Attention: qkv (qkv_bias=False -> zero bias), proj
        "qkv_w": (0.02 * jax.random.normal(keys[0], (C, 3 * C))).astype(jnp.float32),
        "qkv_b": jnp.zeros((3 * C,), jnp.float32),
        "proj_w": (0.02 * jax.random.normal(keys[1], (C, C))).astype(jnp.float32),
        "proj_b": (0.02 * jax.random.normal(keys[2], (C,))).astype(jnp.float32),
        # MLP
        "fc1_w": (0.02 * jax.random.normal(keys[3], (C, H_mlp))).astype(jnp.float32),
        "fc1_b": (0.02 * jax.random.normal(keys[4], (H_mlp,))).astype(jnp.float32),
        "fc2_w": (0.02 * jax.random.normal(keys[5], (H_mlp, C))).astype(jnp.float32),
        "fc2_b": (0.02 * jax.random.normal(keys[6], (C,))).astype(jnp.float32),
    }

    x = jax.random.normal(keys[7], (B, N, C), jnp.float32)

    prepped = prepare_params(params, num_heads, C)
    out = rpe_block_forward(x, prepped, num_heads)
    out = jax.block_until_ready(out)

    ref = _ref_forward(x, params, num_heads)
    assert out.shape == (B, N, C)
    # bf16 MXU operands / bf16 inter-kernel activations with f32 accumulation.
    assert jnp.allclose(out, ref, rtol=2e-2, atol=2e-2), "Pallas output mismatch vs reference"

    print("KERNEL_OK")
</pallas_src>

<mosaic_0001>
module attributes {stable_mosaic.version = 11 : i64} {
  func.func @_ln_matmul_kernel(%arg0: i32, %arg1: i32, %arg2: memref<256x256xf32, #tpu.memory_space<vmem>>, %arg3: memref<1x256xf32, #tpu.memory_space<vmem>>, %arg4: memref<1x256xf32, #tpu.memory_space<vmem>>, %arg5: memref<256x256xbf16, #tpu.memory_space<vmem>>, %arg6: memref<1x256xf32, #tpu.memory_space<vmem>>, %arg7: memref<256x256xbf16, #tpu.memory_space<vmem>>) attributes {dimension_semantics = [#tpu.dimension_semantics<parallel>, #tpu.dimension_semantics<parallel>], iteration_bounds = array<i64: 1, 3>, scalar_prefetch = 0 : i64, scratch_operands = 0 : i64, tpu.core_type = #tpu.core_type<tc>, window_params = [{transform_indices = @transform_0, window_bounds = array<i64: 256, 256>}, {pipeline_mode = #tpu.pipeline_mode<synchronous>, transform_indices = @transform_1, window_bounds = array<i64: 1, 256>}, {pipeline_mode = #tpu.pipeline_mode<synchronous>, transform_indices = @transform_2, window_bounds = array<i64: 1, 256>}, {transform_indices = @transform_3, window_bounds = array<i64: 256, 256>}, {transform_indices = @transform_4, window_bounds = array<i64: 1, 256>}, {transform_indices = @transform_5, window_bounds = array<i64: 256, 256>}]} {
    %c0 = arith.constant 0 : index
    %c0_0 = arith.constant 0 : index
    %0 = vector.load %arg2[%c0, %c0_0] : memref<256x256xf32, #tpu.memory_space<vmem>>, vector<256x256xf32>
    %cst = arith.constant dense<0.000000e+00> : vector<256xf32>
    %1 = vector.multi_reduction <add>, %0, %cst [1] : vector<256x256xf32> to vector<256xf32>
    %2 = vector.shape_cast %1 : vector<256xf32> to vector<256x1xf32>
    %cst_1 = arith.constant 2.560000e+02 : f32
    %3 = vector.broadcast %cst_1 : f32 to vector<256x1xf32>
    %4 = arith.divf %2, %3 : vector<256x1xf32>
    %5 = vector.broadcast %4 : vector<256x1xf32> to vector<256x256xf32>
    %6 = arith.subf %0, %5 : vector<256x256xf32>
    %7 = arith.mulf %6, %6 : vector<256x256xf32>
    %cst_2 = arith.constant dense<0.000000e+00> : vector<256xf32>
    %8 = vector.multi_reduction <add>, %7, %cst_2 [1] : vector<256x256xf32> to vector<256xf32>
    %9 = vector.shape_cast %8 : vector<256xf32> to vector<256x1xf32>
    %cst_3 = arith.constant 2.560000e+02 : f32
    %10 = vector.broadcast %cst_3 : f32 to vector<256x1xf32>
    %11 = arith.divf %9, %10 : vector<256x1xf32>
    %cst_4 = arith.constant 9.99999974E-6 : f32
    %12 = vector.broadcast %cst_4 : f32 to vector<256x1xf32>
    %13 = arith.addf %11, %12 : vector<256x1xf32>
    %14 = math.rsqrt %13 : vector<256x1xf32>
    %15 = vector.broadcast %14 : vector<256x1xf32> to vector<256x256xf32>
    %16 = arith.mulf %6, %15 : vector<256x256xf32>
    %c0_5 = arith.constant 0 : index
    %c0_6 = arith.constant 0 : index
    %17 = vector.load %arg3[%c0_5, %c0_6] : memref<1x256xf32, #tpu.memory_space<vmem>>, vector<1x256xf32>
    %18 = vector.broadcast %17 : vector<1x256xf32> to vector<256x256xf32>
    %19 = arith.mulf %16, %18 : vector<256x256xf32>
    %c0_7 = arith.constant 0 : index
    %c0_8 = arith.constant 0 : index
    %20 = vector.load %arg4[%c0_7, %c0_8] : memref<1x256xf32, #tpu.memory_space<vmem>>, vector<1x256xf32>
    %21 = vector.broadcast %20 : vector<1x256xf32> to vector<256x256xf32>
    %22 = arith.addf %19, %21 : vector<256x256xf32>
    %23 = arith.truncf %22 : vector<256x256xf32> to vector<256x256xbf16>
    %c0_9 = arith.constant 0 : index
    %c0_10 = arith.constant 0 : index
    %24 = vector.load %arg5[%c0_9, %c0_10] : memref<256x256xbf16, #tpu.memory_space<vmem>>, vector<256x256xbf16>
    %cst_11 = arith.constant dense<0.000000e+00> : vector<256x256xf32>
    %25 = tpu.matmul %23, %24, %cst_11 {dimension_numbers = #tpu.dot_dimension_numbers<[1], [0], [0], [1], [0, 0, 1, 1], [], []>} : vector<256x256xbf16>, vector<256x256xbf16>, vector<256x256xf32> -> vector<256x256xf32>
    %c0_12 = arith.constant 0 : index
    %c0_13 = arith.constant 0 : index
    %26 = vector.load %arg6[%c0_12, %c0_13] : memref<1x256xf32, #tpu.memory_space<vmem>>, vector<1x256xf32>
    %27 = vector.broadcast %26 : vector<1x256xf32> to vector<256x256xf32>
    %28 = arith.addf %25, %27 : vector<256x256xf32>
    %29 = arith.truncf %28 : vector<256x256xf32> to vector<256x256xbf16>
    %c0_14 = arith.constant 0 : index
    %c0_15 = arith.constant 0 : index
    %30 = vector.load %arg7[%c0_14, %c0_15] : memref<256x256xbf16, #tpu.memory_space<vmem>>, vector<256x256xbf16>
    tpu.vector_store %arg7[%c0_14, %c0_15], %29 {strides = array<i32>} : memref<256x256xbf16, #tpu.memory_space<vmem>>, vector<256x256xbf16>,
    return
  }
  func.func @transform_0(%arg0: i32, %arg1: i32) -> (i32, i32) {
    %c0_i32 = arith.constant 0 : i32
    %c0_i32_0 = arith.constant 0 : i32
    return %arg0, %c0_i32 : i32, i32
  }
  func.func @transform_1(%arg0: i32, %arg1: i32) -> (i32, i32) {
    %c0_i32 = arith.constant 0 : i32
    %c0_i32_0 = arith.constant 0 : i32
    %c0_i32_1 = arith.constant 0 : i32
    return %c0_i32, %c0_i32_0 : i32, i32
  }
  func.func @transform_2(%arg0: i32, %arg1: i32) -> (i32, i32) {
    %c0_i32 = arith.constant 0 : i32
    %c0_i32_0 = arith.constant 0 : i32
    %c0_i32_1 = arith.constant 0 : i32
    return %c0_i32, %c0_i32_0 : i32, i32
  }
  func.func @transform_3(%arg0: i32, %arg1: i32) -> (i32, i32) {
    %c0_i32 = arith.constant 0 : i32
    %c0_i32_0 = arith.constant 0 : i32
    return %c0_i32, %arg1 : i32, i32
  }
  func.func @transform_4(%arg0: i32, %arg1: i32) -> (i32, i32) {
    %c0_i32 = arith.constant 0 : i32
    %c0_i32_0 = arith.constant 0 : i32
    return %c0_i32, %arg1 : i32, i32
  }
  func.func @transform_5(%arg0: i32, %arg1: i32) -> (i32, i32) {
    %c0_i32 = arith.constant 0 : i32
    return %arg0, %arg1 : i32, i32
  }
}

</mosaic_0001>

<llo_original>
// kernel: tpu_custom_call.1
$region0: #{tpu_custom_call.1}
  #allocation0 [shape = 'u32[]', space=smem, size = 0x4, offset = 0x4, fixed_abs, tag = 'smem constant byte address 0x4 - core index']
  #allocation1 [shape = 'u32[144,128]{1,0:T(1,128)}', space=vmem, size = 0x12000, scoped, tag = 'internal scratch']
  %s0 = inlined_call_operand.hbm [shape: f32[256,256], index: 0, kind: input, shape index: {}]
  %s1 = inlined_call_operand.vmem [shape: f32[1,256], index: 1, kind: input, shape index: {}]
  %s2 = inlined_call_operand.vmem [shape: f32[1,256], index: 2, kind: input, shape index: {}]
  %s3 = inlined_call_operand.hbm [shape: bf16[256,768], index: 3, kind: input, shape index: {}]
  %s4 = inlined_call_operand.vmem [shape: f32[1,768], index: 4, kind: input, shape index: {}]
  %s5 = inlined_call_operand.hbm [shape: bf16[256,768], index: 5, kind: output, shape index: {}]
  %s6 = sld [smem:[#allocation0]]
  $region61: #{tpu_custom_call.1} parent=0
    _
  %s8 = ssub.s32 1, %s6
  %s9 = scalar_select 0, %s8, %s6
  $region1: #{tpu_custom_call.1} parent=0
    #allocation2 [shape = 'u8[262144]{0}', space=vmem, size = 0x40000, scoped, tag = 'input window, operand 0, single buffered']
    #allocation3 [shape = 's32[2]{0}', space=sflag, size = 0x8, scoped, tag = 'scoped memory for tpu_custom_call.1']
    #allocation4 [shape = 's32[2]{0}', space=sflag, size = 0x8, scoped, tag = 'scoped memory for tpu_custom_call.1']
    #allocation5 [shape = 'u8[262144]{0}', space=vmem, size = 0x40000, scoped, tag = 'input window, operand 3']
    #allocation6 [shape = 's32[2]{0}', space=sflag, size = 0x8, scoped, tag = 'scoped memory for tpu_custom_call.1']
    #allocation7 [shape = 'u8[262144]{0}', space=vmem, size = 0x40000, scoped, tag = 'output window, operand 0']
    %10 = vsyncpa [#allocation3], 0
    %11 = vsyncpa [#allocation6], 0
    %s12 = scalar_lea.sflag [#allocation6], 1
    %13 = vsyncpa %s12, 0
    %14 = vsyncpa [#allocation4], 0
    %s15 = scalar_lea.sflag [#allocation4], 1
    %16 = vsyncpa %s15, 0
    loop: start=0, step=1, limit=5
    $region2: #{tpu_custom_call.1} parent=1 // loop_pre_header
      _
    $region3: #{tpu_custom_call.1} parent=1 // loop_header
      %s18 = sphi 0, %s22
      %p19 = scmp.ge.s32.totalorder %s18, 5
      %s25 = sphi 0, %s37
      %s26 = sphi 0, %s33
      %s27 = sphi 0, %s25
      %s28 = sphi 0, %s26
      %s29 = sphi 0, %s27
      %s30 = sphi 0, %s28
      %s40 = sphi 0, %s42
      %s43 = sphi 0, %s40
      %s44 = sphi 0, %s43
      %s60 = sphi 0, %s44
      %s64 = sphi 0, %s64
      %s66 = sphi 0, %s64
      %s67 = sphi 0, %s66
      %s81 = sphi 0, %s67
      %s85 = sphi 0, %s85
      %s87 = sphi 0, %s85
      %s88 = sphi 0, %s87
      %s102 = sphi 0, %s88
      %s108 = sphi 0, %s110
      %s111 = sphi 0, %s108
      %s112 = sphi 0, %s111
      %s128 = sphi 0, %s112
      %s134 = sphi 0, %s136
      %s137 = sphi 0, %s134
      %s138 = sphi 0, %s137
      %s154 = sphi 0, %s138
      %s162 = sphi 0, %s164
      %s165 = sphi 0, %s162
      %s166 = sphi 0, %s165
      %s182 = sphi 0, %s166
    $region4: #{tpu_custom_call.1} parent=1 // loop_header_branch
      %21 = sbr.rel (%p19) target = $region8
    $region5: #{tpu_custom_call.1} parent=1 // loop_body
      %s23 = ssub.s32 %s18, 1
      %s24 = ssub.s32 %s18, 2
      %s31 = sadd.s32 1, %s26
      %p32 = scmp.ge.s32.totalorder %s31, 3
      %s33 = scalar_select %p32, 0, %s31
      %s34 = sadd.s32 1, %s25
      %s35 = scalar_select %p32, %s34, %s25
      %p36 = scmp.ge.s32.totalorder %s35, 1
      %s37 = scalar_select %p36, 0, %s35
      %s38 = ssub.s32 %s25, %s37
      %p39 = scmp.eq.s32.totalorder %s38, 0
      %s41 = sadd.s32 %s40, 1
      %s42 = scalar_select %p39, %s40, %s41
      %p45 = pneg %p39
      %p46 = scmp.eq.s32.totalorder %s18, 2
      %p47 = por %p45, %p46
      %p48 = scmp.ne.s32.totalorder %s40, %s43
      %p49 = scmp.eq.s32.totalorder %s18, 0
      %p50 = por %p48, %p49
      %p51 = scmp.ne.s32.totalorder %s40, %s43
      %p52 = scmp.eq.s32.totalorder %s23, 2
      %p53 = por %p51, %p52
      %p54 = scmp.ne.s32.totalorder %s43, %s44
      %p55 = scmp.eq.s32.totalorder %s23, 0
      %p56 = por %p54, %p55
      %p57 = scmp.ne.s32.totalorder %s43, %s44
      %p58 = scmp.eq.s32.totalorder %s24, 2
      %p59 = por %p57, %p58
      %p61 = scmp.ne.s32.totalorder %s44, %s60
      %p62 = scmp.eq.s32.totalorder %s24, 0
      %p63 = por %p61, %p62
      %s65 = sadd.s32 %s64, 1
      %p68 = scmp.eq.s32.totalorder %s18, 2
      %p69 = scmp.ne.s32.totalorder %s64, %s66
      %p70 = scmp.eq.s32.totalorder %s18, 0
      %p71 = por %p69, %p70
      %p72 = scmp.ne.s32.totalorder %s64, %s66
      %p73 = scmp.eq.s32.totalorder %s23, 2
      %p74 = por %p72, %p73
      %p75 = scmp.ne.s32.totalorder %s66, %s67
      %p76 = scmp.eq.s32.totalorder %s23, 0
      %p77 = por %p75, %p76
      %p78 = scmp.ne.s32.totalorder %s66, %s67
      %p79 = scmp.eq.s32.totalorder %s24, 2
      %p80 = por %p78, %p79
      %p82 = scmp.ne.s32.totalorder %s67, %s81
      %p83 = scmp.eq.s32.totalorder %s24, 0
      %p84 = por %p82, %p83
      %s86 = sadd.s32 %s85, 1
      %p89 = scmp.eq.s32.totalorder %s18, 2
      %p90 = scmp.ne.s32.totalorder %s85, %s87
      %p91 = scmp.eq.s32.totalorder %s18, 0
      %p92 = por %p90, %p91
      %p93 = scmp.ne.s32.totalorder %s85, %s87
      %p94 = scmp.eq.s32.totalorder %s23, 2
      %p95 = por %p93, %p94
      %p96 = scmp.ne.s32.totalorder %s87, %s88
      %p97 = scmp.eq.s32.totalorder %s23, 0
      %p98 = por %p96, %p97
      %p99 = scmp.ne.s32.totalorder %s87, %s88
      %p100 = scmp.eq.s32.totalorder %s24, 2
      %p101 = por %p99, %p100
      %p103 = scmp.ne.s32.totalorder %s88, %s102
      %p104 = scmp.eq.s32.totalorder %s24, 0
      %p105 = por %p103, %p104
      %s106 = ssub.s32 %s26, %s33
      %p107 = scmp.eq.s32.totalorder %s106, 0
      %s109 = sadd.s32 %s108, 1
      %s110 = scalar_select %p107, %s108, %s109
      %p113 = pneg %p107
      %p114 = scmp.eq.s32.totalorder %s18, 2
      %p115 = por %p113, %p114
      %p116 = scmp.ne.s32.totalorder %s108, %s111
      %p117 = scmp.eq.s32.totalorder %s18, 0
      %p118 = por %p116, %p117
      %p119 = scmp.ne.s32.totalorder %s108, %s111
      %p120 = scmp.eq.s32.totalorder %s23, 2
      %p121 = por %p119, %p120
      %p122 = scmp.ne.s32.totalorder %s111, %s112
      %p123 = scmp.eq.s32.totalorder %s23, 0
      %p124 = por %p122, %p123
      %p125 = scmp.ne.s32.totalorder %s111, %s112
      %p126 = scmp.eq.s32.totalorder %s24, 2
      %p127 = por %p125, %p126
      %p129 = scmp.ne.s32.totalorder %s112, %s128
      %p130 = scmp.eq.s32.totalorder %s24, 0
      %p131 = por %p129, %p130
      %s132 = ssub.s32 %s26, %s33
      %p133 = scmp.eq.s32.totalorder %s132, 0
      %s135 = sadd.s32 %s134, 1
      %s136 = scalar_select %p133, %s134, %s135
      %p139 = pneg %p133
      %p140 = scmp.eq.s32.totalorder %s18, 2
      %p141 = por %p139, %p140
      %p142 = scmp.ne.s32.totalorder %s134, %s137
      %p143 = scmp.eq.s32.totalorder %s18, 0
      %p144 = por %p142, %p143
      %p145 = scmp.ne.s32.totalorder %s134, %s137
      %p146 = scmp.eq.s32.totalorder %s23, 2
      %p147 = por %p145, %p146
      %p148 = scmp.ne.s32.totalorder %s137, %s138
      %p149 = scmp.eq.s32.totalorder %s23, 0
      %p150 = por %p148, %p149
      %p151 = scmp.ne.s32.totalorder %s137, %s138
      %p152 = scmp.eq.s32.totalorder %s24, 2
      %p153 = por %p151, %p152
      %p155 = scmp.ne.s32.totalorder %s138, %s154
      %p156 = scmp.eq.s32.totalorder %s24, 0
      %p157 = por %p155, %p156
      %s158 = ssub.s32 %s25, %s37
      %s159 = ssub.s32 %s26, %s33
      %s160 = sor.u32 %s158, %s159
      %p161 = scmp.eq.s32.totalorder %s160, 0
      %s163 = sadd.s32 %s162, 1
      %s164 = scalar_select %p161, %s162, %s163
      %p167 = pneg %p161
      %p168 = scmp.eq.s32.totalorder %s18, 2
      %p169 = por %p167, %p168
      %p170 = scmp.ne.s32.totalorder %s162, %s165
      %p171 = scmp.eq.s32.totalorder %s18, 0
      %p172 = por %p170, %p171
      %p173 = scmp.ne.s32.totalorder %s162, %s165
      %p174 = scmp.eq.s32.totalorder %s23, 2
      %p175 = por %p173, %p174
      %p176 = scmp.ne.s32.totalorder %s165, %s166
      %p177 = scmp.eq.s32.totalorder %s23, 0
      %p178 = por %p176, %p177
      %p179 = scmp.ne.s32.totalorder %s165, %s166
      %p180 = scmp.eq.s32.totalorder %s24, 2
      %p181 = por %p179, %p180
      %p183 = scmp.ne.s32.totalorder %s166, %s182
      %p184 = scmp.eq.s32.totalorder %s24, 0
      %p185 = por %p183, %p184
      %p186 = scmp.le.s32.totalorder 1, %s18
      %p187 = scmp.lt.s32.totalorder %s18, 4
      %p188 = pnand %p186, %p187
      %p189 = pneg %p188
      // Predicated region
      $region9: #{tpu_custom_call.1} parent=5 // pred_check
        _
      $region10: #{tpu_custom_call.1} parent=5 // pred_check_branch
        %191 = sbr.rel (%p188) target = $region12
      $region11: #{tpu_custom_call.1} parent=5 // pred_region
        %s192 = ssub.s32 %s18, 1
        // Predicated region
        $region13: #{tpu_custom_call.1} parent=11 // pred_check
          %p193 = pneg %p56
        $region14: #{tpu_custom_call.1} parent=11 // pred_check_branch
          %195 = sbr.rel (%p193) target = $region16
        $region15: #{tpu_custom_call.1} parent=11 // pred_region
          %s196 = smul.u32 32, %s27
          %s198 = ssub.s32 8192, 8192
          %199 = vsyncadd [#allocation3], %s198
          %s200 = smul.addr %s196, 2
          %s201 = smul.addr %s200, 128
          %s202 = scalar_lea.hbm %s0, %s201
          %s203 = sshll.u32 [#allocation2], 4
          %s204 = int_to_ptr.vmem [resolvable:$true] %s203
          %209 = dma.hbm_to_vmem [thread:$0]  %s202, 8192, %s204, [#allocation3], 256, 256, 16
        $region16: #{tpu_custom_call.1} parent=11 // pred_fallthru
          _
        // Predicated region
        $region17: #{tpu_custom_call.1} parent=11 // pred_check
          %p210 = pneg %p77
        $region18: #{tpu_custom_call.1} parent=11 // pred_check_branch
          %212 = sbr.rel (%p210) target = $region20
        $region19: #{tpu_custom_call.1} parent=11 // pred_region
          _
        $region20: #{tpu_custom_call.1} parent=11 // pred_fallthru
          _
        // Predicated region
        $region21: #{tpu_custom_call.1} parent=11 // pred_check
          %p213 = pneg %p98
        $region22: #{tpu_custom_call.1} parent=11 // pred_check_branch
          %215 = sbr.rel (%p213) target = $region24
        $region23: #{tpu_custom_call.1} parent=11 // pred_region
          _
        $region24: #{tpu_custom_call.1} parent=11 // pred_fallthru
          _
      $region12: #{tpu_custom_call.1} parent=5 // pred_fallthru
        _
      %p216 = scmp.lt.s32.totalorder %s18, 3
      // Predicated region
      $region25: #{tpu_custom_call.1} parent=5 // pred_check
        %p217 = pneg %p216
      $region26: #{tpu_custom_call.1} parent=5 // pred_check_branch
        %219 = sbr.rel (%p217) target = $region28
      $region27: #{tpu_custom_call.1} parent=5 // pred_region
        // Predicated region
        $region29: #{tpu_custom_call.1} parent=27 // pred_check
          %p220 = pneg %p118
        $region30: #{tpu_custom_call.1} parent=27 // pred_check_branch
          %222 = sbr.rel (%p220) target = $region32
        $region31: #{tpu_custom_call.1} parent=27 // pred_region
          %s223 = sand.u32 %s108, 1
          %s224 = scalar_lea.sflag [#allocation6], %s223
          %s225 = sand.u32 %s108, 1
          %s226 = smul.addr %s225, 256
          %s227 = scalar_lea.vmem [#allocation5], %s226
          %s228 = smul.u32 2, %s26
          %s230 = ssub.s32 4096, 4096
          %231 = vsyncadd %s224, %s230
          %s232 = smul.addr %s228, 64
          %s233 = scalar_lea.hbm %s3, %s232
          %s234 = sshll.u32 %s227, 4
          %s235 = int_to_ptr.vmem [resolvable:$true] %s234
          %240 = dma.hbm_to_vmem [thread:$0]  %s233, 4096, %s235, %s224, 384, 128, 8
        $region32: #{tpu_custom_call.1} parent=27 // pred_fallthru
          _
        // Predicated region
        $region33: #{tpu_custom_call.1} parent=27 // pred_check
          %p241 = pneg %p144
        $region34: #{tpu_custom_call.1} parent=27 // pred_check_branch
          %243 = sbr.rel (%p241) target = $region36
        $region35: #{tpu_custom_call.1} parent=27 // pred_region
          %s244 = smul.u32 2, %s26
          %p245 = scmp.lt.s32.totalorder %s244, 5
          %s246 = scalar_select %p245, %s244, 5
          %s247 = scalar_lea.vmem %s4, %s246
          %s248 = smul.u32 2, %s26
        $region36: #{tpu_custom_call.1} parent=27 // pred_fallthru
          _
      $region28: #{tpu_custom_call.1} parent=5 // pred_fallthru
        _
      %p249 = scmp.le.s32.totalorder 1, %s18
      %p250 = scmp.lt.s32.totalorder %s18, 4
      %p251 = pnand %p249, %p250
      %p252 = pneg %p251
      // Predicated region
      $region37: #{tpu_custom_call.1} parent=5 // pred_check
        _
      $region38: #{tpu_custom_call.1} parent=5 // pred_check_branch
        %254 = sbr.rel (%p251) target = $region40
      $region39: #{tpu_custom_call.1} parent=5 // pred_region
        %s255 = ssub.s32 %s18, 1
        // Predicated region
        $region41: #{tpu_custom_call.1} parent=39 // pred_check
          %p256 = pneg %p56
        $region42: #{tpu_custom_call.1} parent=39 // pred_check_branch
          %258 = sbr.rel (%p256) target = $region44
        $region43: #{tpu_custom_call.1} parent=39 // pred_region
          %259 = dma.done [#allocation3], 8192
        $region44: #{tpu_custom_call.1} parent=39 // pred_fallthru
          _
        %s260 = sand.u32 %s111, 1
        %s261 = scalar_lea.sflag [#allocation6], %s260
        %s262 = sand.u32 %s111, 1
        %s263 = smul.addr %s262, 256
        %s264 = scalar_lea.vmem [#allocation5], %s263
        // Predicated region
        $region45: #{tpu_custom_call.1} parent=39 // pred_check
          %p265 = pneg %p124
        $region46: #{tpu_custom_call.1} parent=39 // pred_check_branch
          %267 = sbr.rel (%p265) target = $region48
        $region47: #{tpu_custom_call.1} parent=39 // pred_region
          %268 = dma.done %s261, 4096
        $region48: #{tpu_custom_call.1} parent=39 // pred_fallthru
          _
        %p269 = pneg %p56
        %p270 = pneg %p53
        %p271 = pneg %p77
        %p272 = pneg %p74
        %p273 = pneg %p98
        %p274 = pneg %p95
        %s275 = sand.u32 %s111, 1
        %s276 = scalar_lea.sflag [#allocation6], %s275
        %s277 = sand.u32 %s111, 1
        %s278 = smul.addr %s277, 256
        %s279 = scalar_lea.vmem [#allocation5], %s278
        %p280 = pneg %p124
        %p281 = pneg %p121
        %s282 = smul.u32 2, %s28
        %p283 = scmp.lt.s32.totalorder %s282, 5
        %s284 = scalar_select %p283, %s282, 5
        %s285 = scalar_lea.vmem %s4, %s284
        %p286 = pneg %p150
        %p287 = pneg %p147
        %p288 = pneg %p178
        %p289 = pneg %p175
        %s290 = sand.u32 %s165, 1
        %s291 = scalar_lea.sflag [#allocation4], %s290
        %s292 = sand.u32 %s165, 1
        %s293 = smul.addr %s292, 256
        %s294 = scalar_lea.vmem [#allocation7], %s293
        %s295 = smul.u32 32, %s27
        %s296 = smul.u32 2, %s28
        %s297 = smul.u32 2, %s28
        %p298 = scmp.lt.s32.totalorder %s297, 5
        %s299 = scalar_select %p298, %s297, 5
        %s300 = scalar_lea.vmem %s4, %s299
        %s301 = smul.u32 2, %s28
        %s302 = smul.u32 32, %s27
        %s303 = smul.u32 2, %s28
        %v304 = vld [vmem:[#allocation2] sm:$0xff]
        %v305 = vld [vmem:[#allocation2 + $0x8] sm:$0xff]
        %v306 = vld [vmem:[#allocation2 + $0x10] sm:$0xff]
        %v307 = vld [vmem:[#allocation2 + $0x18] sm:$0xff]
        %v308 = vld [vmem:[#allocation2 + $0x20] sm:$0xff]
        %v309 = vld [vmem:[#allocation2 + $0x28] sm:$0xff]
        %v310 = vld [vmem:[#allocation2 + $0x30] sm:$0xff]
        %v311 = vld [vmem:[#allocation2 + $0x38] sm:$0xff]
        %v312 = vld [vmem:[#allocation2 + $0x40] sm:$0xff]
        %v313 = vld [vmem:[#allocation2 + $0x48] sm:$0xff]
        %v314 = vld [vmem:[#allocation2 + $0x50] sm:$0xff]
        %v315 = vld [vmem:[#allocation2 + $0x58] sm:$0xff]
        %v316 = vld [vmem:[#allocation2 + $0x60] sm:$0xff]
        %v317 = vld [vmem:[#allocation2 + $0x68] sm:$0xff]
        %v318 = vld [vmem:[#allocation2 + $0x70] sm:$0xff]
        %v319 = vld [vmem:[#allocation2 + $0x78] sm:$0xff]
        %v320 = vld [vmem:[#allocation2 + $0x80] sm:$0xff]
        %v321 = vld [vmem:[#allocation2 + $0x88] sm:$0xff]
        %v322 = vld [vmem:[#allocation2 + $0x90] sm:$0xff]
        %v323 = vld [vmem:[#allocation2 + $0x98] sm:$0xff]
        %v324 = vld [vmem:[#allocation2 + $0xa0] sm:$0xff]
        %v325 = vld [vmem:[#allocation2 + $0xa8] sm:$0xff]
        %v326 = vld [vmem:[#allocation2 + $0xb0] sm:$0xff]
        %v327 = vld [vmem:[#allocation2 + $0xb8] sm:$0xff]
        %v328 = vld [vmem:[#allocation2 + $0xc0] sm:$0xff]
        %v329 = vld [vmem:[#allocation2 + $0xc8] sm:$0xff]
        %v330 = vld [vmem:[#allocation2 + $0xd0] sm:$0xff]
        %v331 = vld [vmem:[#allocation2 + $0xd8] sm:$0xff]
        %v332 = vld [vmem:[#allocation2 + $0xe0] sm:$0xff]
        %v333 = vld [vmem:[#allocation2 + $0xe8] sm:$0xff]
        %v334 = vld [vmem:[#allocation2 + $0xf0] sm:$0xff]
        %v335 = vld [vmem:[#allocation2 + $0xf8] sm:$0xff]
        %v336 = vld [vmem:[#allocation2 + $0x100] sm:$0xff]
        %v337 = vld [vmem:[#allocation2 + $0x108] sm:$0xff]
        %v338 = vld [vmem:[#allocation2 + $0x110] sm:$0xff]
        %v339 = vld [vmem:[#allocation2 + $0x118] sm:$0xff]
        %v340 = vld [vmem:[#allocation2 + $0x120] sm:$0xff]
        %v341 = vld [vmem:[#allocation2 + $0x128] sm:$0xff]
        %v342 = vld [vmem:[#allocation2 + $0x130] sm:$0xff]
        %v343 = vld [vmem:[#allocation2 + $0x138] sm:$0xff]
        %v344 = vld [vmem:[#allocation2 + $0x140] sm:$0xff]
        %v345 = vld [vmem:[#allocation2 + $0x148] sm:$0xff]
        %v346 = vld [vmem:[#allocation2 + $0x150] sm:$0xff]
        %v347 = vld [vmem:[#allocation2 + $0x158] sm:$0xff]
        %v348 = vld [vmem:[#allocation2 + $0x160] sm:$0xff]
        %v349 = vld [vmem:[#allocation2 + $0x168] sm:$0xff]
        %v350 = vld [vmem:[#allocation2 + $0x170] sm:$0xff]
        %v351 = vld [vmem:[#allocation2 + $0x178] sm:$0xff]
        %v352 = vld [vmem:[#allocation2 + $0x180] sm:$0xff]
        %v353 = vld [vmem:[#allocation2 + $0x188] sm:$0xff]
        %v354 = vld [vmem:[#allocation2 + $0x190] sm:$0xff]
        %v355 = vld [vmem:[#allocation2 + $0x198] sm:$0xff]
        %v356 = vld [vmem:[#allocation2 + $0x1a0] sm:$0xff]
        %v357 = vld [vmem:[#allocation2 + $0x1a8] sm:$0xff]
        %v358 = vld [vmem:[#allocation2 + $0x1b0] sm:$0xff]
        %v359 = vld [vmem:[#allocation2 + $0x1b8] sm:$0xff]
        %v360 = vld [vmem:[#allocation2 + $0x1c0] sm:$0xff]
        %v361 = vld [vmem:[#allocation2 + $0x1c8] sm:$0xff]
        %v362 = vld [vmem:[#allocation2 + $0x1d0] sm:$0xff]
        %v363 = vld [vmem:[#allocation2 + $0x1d8] sm:$0xff]
        %v364 = vld [vmem:[#allocation2 + $0x1e0] sm:$0xff]
        %v365 = vld [vmem:[#allocation2 + $0x1e8] sm:$0xff]
        %v366 = vld [vmem:[#allocation2 + $0x1f0] sm:$0xff]
        %v367 = vld [vmem:[#allocation2 + $0x1f8] sm:$0xff]
        %v368 = vadd.f32 %v304, %v305
        %369 = vadd.xlane.f32.xlu0 %v368
        %v370 = vpop.xlane.xlu0 %369
        %v371 = vadd.f32 %v306, %v307
        %372 = vadd.xlane.f32.xlu0 %v371
        %v373 = vpop.xlane.xlu0 %372
        %v374 = vadd.f32 %v308, %v309
        %375 = vadd.xlane.f32.xlu0 %v374
        %v376 = vpop.xlane.xlu0 %375
        %v377 = vadd.f32 %v310, %v311
        %378 = vadd.xlane.f32.xlu0 %v377
        %v379 = vpop.xlane.xlu0 %378
        %v380 = vadd.f32 %v312, %v313
        %381 = vadd.xlane.f32.xlu0 %v380
        %v382 = vpop.xlane.xlu0 %381
        %v383 = vadd.f32 %v314, %v315
        %384 = vadd.xlane.f32.xlu0 %v383
        %v385 = vpop.xlane.xlu0 %384
        %v386 = vadd.f32 %v316, %v317
        %387 = vadd.xlane.f32.xlu0 %v386
        %v388 = vpop.xlane.xlu0 %387
        %v389 = vadd.f32 %v318, %v319
        %390 = vadd.xlane.f32.xlu0 %v389
        %v391 = vpop.xlane.xlu0 %390
        %v392 = vadd.f32 %v320, %v321
        %393 = vadd.xlane.f32.xlu0 %v392
        %v394 = vpop.xlane.xlu0 %393
        %v395 = vadd.f32 %v322, %v323
        %396 = vadd.xlane.f32.xlu0 %v395
        %v397 = vpop.xlane.xlu0 %396
        %v398 = vadd.f32 %v324, %v325
        %399 = vadd.xlane.f32.xlu0 %v398
        %v400 = vpop.xlane.xlu0 %399
        %v401 = vadd.f32 %v326, %v327
        %402 = vadd.xlane.f32.xlu0 %v401
        %v403 = vpop.xlane.xlu0 %402
        %v404 = vadd.f32 %v328, %v329
        %405 = vadd.xlane.f32.xlu0 %v404
        %v406 = vpop.xlane.xlu0 %405
        %v407 = vadd.f32 %v330, %v331
        %408 = vadd.xlane.f32.xlu0 %v407
        %v409 = vpop.xlane.xlu0 %408
        %v410 = vadd.f32 %v332, %v333
        %411 = vadd.xlane.f32.xlu0 %v410
        %v412 = vpop.xlane.xlu0 %411
        %v413 = vadd.f32 %v334, %v335
        %414 = vadd.xlane.f32.xlu0 %v413
        %v415 = vpop.xlane.xlu0 %414
        %v416 = vadd.f32 %v336, %v337
        %417 = vadd.xlane.f32.xlu0 %v416
        %v418 = vpop.xlane.xlu0 %417
        %v419 = vadd.f32 %v338, %v339
        %420 = vadd.xlane.f32.xlu0 %v419
        %v421 = vpop.xlane.xlu0 %420
        %v422 = vadd.f32 %v340, %v341
        %423 = vadd.xlane.f32.xlu0 %v422
        %v424 = vpop.xlane.xlu0 %423
        %v425 = vadd.f32 %v342, %v343
        %426 = vadd.xlane.f32.xlu0 %v425
        %v427 = vpop.xlane.xlu0 %426
        %v428 = vadd.f32 %v344, %v345
        %429 = vadd.xlane.f32.xlu0 %v428
        %v430 = vpop.xlane.xlu0 %429
        %v431 = vadd.f32 %v346, %v347
        %432 = vadd.xlane.f32.xlu0 %v431
        %v433 = vpop.xlane.xlu0 %432
        %v434 = vadd.f32 %v348, %v349
        %435 = vadd.xlane.f32.xlu0 %v434
        %v436 = vpop.xlane.xlu0 %435
        %v437 = vadd.f32 %v350, %v351
        %438 = vadd.xlane.f32.xlu0 %v437
        %v439 = vpop.xlane.xlu0 %438
        %v440 = vadd.f32 %v352, %v353
        %441 = vadd.xlane.f32.xlu0 %v440
        %v442 = vpop.xlane.xlu0 %441
        %v443 = vadd.f32 %v354, %v355
        %444 = vadd.xlane.f32.xlu0 %v443
        %v445 = vpop.xlane.xlu0 %444
        %v446 = vadd.f32 %v356, %v357
        %447 = vadd.xlane.f32.xlu0 %v446
        %v448 = vpop.xlane.xlu0 %447
        %v449 = vadd.f32 %v358, %v359
        %450 = vadd.xlane.f32.xlu0 %v449
        %v451 = vpop.xlane.xlu0 %450
        %v452 = vadd.f32 %v360, %v361
        %453 = vadd.xlane.f32.xlu0 %v452
        %v454 = vpop.xlane.xlu0 %453
        %v455 = vadd.f32 %v362, %v363
        %456 = vadd.xlane.f32.xlu0 %v455
        %v457 = vpop.xlane.xlu0 %456
        %v458 = vadd.f32 %v364, %v365
        %459 = vadd.xlane.f32.xlu0 %v458
        %v460 = vpop.xlane.xlu0 %459
        %v461 = vadd.f32 %v366, %v367
        %462 = vadd.xlane.f32.xlu0 %v461
        %v463 = vpop.xlane.xlu0 %462
        %v464 = vrcp.pop 256.0
        %v465 = vmul.f32 %v370, %v464
        %v466 = vmul.f32 %v373, %v464
        %v467 = vmul.f32 %v376, %v464
        %v468 = vmul.f32 %v379, %v464
        %v469 = vmul.f32 %v382, %v464
        %v470 = vmul.f32 %v385, %v464
        %v471 = vmul.f32 %v388, %v464
        %v472 = vmul.f32 %v391, %v464
        %v473 = vmul.f32 %v394, %v464
        %v474 = vmul.f32 %v397, %v464
        %v475 = vmul.f32 %v400, %v464
        %v476 = vmul.f32 %v403, %v464
        %v477 = vmul.f32 %v406, %v464
        %v478 = vmul.f32 %v409, %v464
        %v479 = vmul.f32 %v412, %v464
        %v480 = vmul.f32 %v415, %v464
        %v481 = vmul.f32 %v418, %v464
        %v482 = vmul.f32 %v421, %v464
        %v483 = vmul.f32 %v424, %v464
        %v484 = vmul.f32 %v427, %v464
        %v485 = vmul.f32 %v430, %v464
        %v486 = vmul.f32 %v433, %v464
        %v487 = vmul.f32 %v436, %v464
        %v488 = vmul.f32 %v439, %v464
        %v489 = vmul.f32 %v442, %v464
        %v490 = vmul.f32 %v445, %v464
        %v491 = vmul.f32 %v448, %v464
        %v492 = vmul.f32 %v451, %v464
        %v493 = vmul.f32 %v454, %v464
        %v494 = vmul.f32 %v457, %v464
        %v495 = vmul.f32 %v460, %v464
        %v496 = vmul.f32 %v463, %v464
        %v497 = vsub.f32 %v304, %v465
        %v498 = vsub.f32 %v305, %v465
        %v499 = vsub.f32 %v306, %v466
        %v500 = vsub.f32 %v307, %v466
        %v501 = vsub.f32 %v308, %v467
        %v502 = vsub.f32 %v309, %v467
        %v503 = vsub.f32 %v310, %v468
        %v504 = vsub.f32 %v311, %v468
        %v505 = vsub.f32 %v312, %v469
        %v506 = vsub.f32 %v313, %v469
        %v507 = vsub.f32 %v314, %v470
        %v508 = vsub.f32 %v315, %v470
        %v509 = vsub.f32 %v316, %v471
        %v510 = vsub.f32 %v317, %v471
        %v511 = vsub.f32 %v318, %v472
        %v512 = vsub.f32 %v319, %v472
        %v513 = vsub.f32 %v320, %v473
        %v514 = vsub.f32 %v321, %v473
        %v515 = vsub.f32 %v322, %v474
        %v516 = vsub.f32 %v323, %v474
        %v517 = vsub.f32 %v324, %v475
        %v518 = vsub.f32 %v325, %v475
        %v519 = vsub.f32 %v326, %v476
        %v520 = vsub.f32 %v327, %v476
        %v521 = vsub.f32 %v328, %v477
        %v522 = vsub.f32 %v329, %v477
        %v523 = vsub.f32 %v330, %v478
        %v524 = vsub.f32 %v331, %v478
        %v525 = vsub.f32 %v332, %v479
        %v526 = vsub.f32 %v333, %v479
        %v527 = vsub.f32 %v334, %v480
        %v528 = vsub.f32 %v335, %v480
        %v529 = vsub.f32 %v336, %v481
        %v530 = vsub.f32 %v337, %v481
        %v531 = vsub.f32 %v338, %v482
        %v532 = vsub.f32 %v339, %v482
        %v533 = vsub.f32 %v340, %v483
        %v534 = vsub.f32 %v341, %v483
        %v535 = vsub.f32 %v342, %v484
        %v536 = vsub.f32 %v343, %v484
        %v537 = vsub.f32 %v344, %v485
        %v538 = vsub.f32 %v345, %v485
        %v539 = vsub.f32 %v346, %v486
        %v540 = vsub.f32 %v347, %v486
        %v541 = vsub.f32 %v348, %v487
        %v542 = vsub.f32 %v349, %v487
        %v543 = vsub.f32 %v350, %v488
        %v544 = vsub.f32 %v351, %v488
        %v545 = vsub.f32 %v352, %v489
        %v546 = vsub.f32 %v353, %v489
        %v547 = vsub.f32 %v354, %v490
        %v548 = vsub.f32 %v355, %v490
        %v549 = vsub.f32 %v356, %v491
        %v550 = vsub.f32 %v357, %v491
        %v551 = vsub.f32 %v358, %v492
        %v552 = vsub.f32 %v359, %v492
        %v553 = vsub.f32 %v360, %v493
        %v554 = vsub.f32 %v361, %v493
        %v555 = vsub.f32 %v362, %v494
        %v556 = vsub.f32 %v363, %v494
        %v557 = vsub.f32 %v364, %v495
        %v558 = vsub.f32 %v365, %v495
        %v559 = vsub.f32 %v366, %v496
        %v560 = vsub.f32 %v367, %v496
        %v561 = vmul.f32 %v497, %v497
        %v562 = vmul.f32 %v498, %v498
        %v563 = vmul.f32 %v499, %v499
        %v564 = vmul.f32 %v500, %v500
        %v565 = vmul.f32 %v501, %v501
        %v566 = vmul.f32 %v502, %v502
        %v567 = vmul.f32 %v503, %v503
        %v568 = vmul.f32 %v504, %v504
        %v569 = vmul.f32 %v505, %v505
        %v570 = vmul.f32 %v506, %v506
        %v571 = vmul.f32 %v507, %v507
        %v572 = vmul.f32 %v508, %v508
        %v573 = vmul.f32 %v509, %v509
        %v574 = vmul.f32 %v510, %v510
        %v575 = vmul.f32 %v511, %v511
        %v576 = vmul.f32 %v512, %v512
        %v577 = vmul.f32 %v513, %v513
        %v578 = vmul.f32 %v514, %v514
        %v579 = vmul.f32 %v515, %v515
        %v580 = vmul.f32 %v516, %v516
        %v581 = vmul.f32 %v517, %v517
        %v582 = vmul.f32 %v518, %v518
        %v583 = vmul.f32 %v519, %v519
        %v584 = vmul.f32 %v520, %v520
        %v585 = vmul.f32 %v521, %v521
        %v586 = vmul.f32 %v522, %v522
        %v587 = vmul.f32 %v523, %v523
        %v588 = vmul.f32 %v524, %v524
        %v589 = vmul.f32 %v525, %v525
        %v590 = vmul.f32 %v526, %v526
        %v591 = vmul.f32 %v527, %v527
        %v592 = vmul.f32 %v528, %v528
        %v593 = vmul.f32 %v529, %v529
        %v594 = vmul.f32 %v530, %v530
        %v595 = vmul.f32 %v531, %v531
        %v596 = vmul.f32 %v532, %v532
        %v597 = vmul.f32 %v533, %v533
        %v598 = vmul.f32 %v534, %v534
        %v599 = vmul.f32 %v535, %v535
        %v600 = vmul.f32 %v536, %v536
        %v601 = vmul.f32 %v537, %v537
        %v602 = vmul.f32 %v538, %v538
        %v603 = vmul.f32 %v539, %v539
        %v604 = vmul.f32 %v540, %v540
        %v605 = vmul.f32 %v541, %v541
        %v606 = vmul.f32 %v542, %v542
        %v607 = vmul.f32 %v543, %v543
        %v608 = vmul.f32 %v544, %v544
        %v609 = vmul.f32 %v545, %v545
        %v610 = vmul.f32 %v546, %v546
        %v611 = vmul.f32 %v547, %v547
        %v612 = vmul.f32 %v548, %v548
        %v613 = vmul.f32 %v549, %v549
        %v614 = vmul.f32 %v550, %v550
        %v615 = vmul.f32 %v551, %v551
        %v616 = vmul.f32 %v552, %v552
        %v617 = vmul.f32 %v553, %v553
        %v618 = vmul.f32 %v554, %v554
        %v619 = vmul.f32 %v555, %v555
        %v620 = vmul.f32 %v556, %v556
        %v621 = vmul.f32 %v557, %v557
        %v622 = vmul.f32 %v558, %v558
        %v623 = vmul.f32 %v559, %v559
        %v624 = vmul.f32 %v560, %v560
        %v625 = vadd.f32 %v561, %v562
        %626 = vadd.xlane.f32.xlu0 %v625
        %v627 = vpop.xlane.xlu0 %626
        %v628 = vadd.f32 %v563, %v564
        %629 = vadd.xlane.f32.xlu0 %v628
        %v630 = vpop.xlane.xlu0 %629
        %v631 = vadd.f32 %v565, %v566
        %632 = vadd.xlane.f32.xlu0 %v631
        %v633 = vpop.xlane.xlu0 %632
        %v634 = vadd.f32 %v567, %v568
        %635 = vadd.xlane.f32.xlu0 %v634
        %v636 = vpop.xlane.xlu0 %635
        %v637 = vadd.f32 %v569, %v570
        %638 = vadd.xlane.f32.xlu0 %v637
        %v639 = vpop.xlane.xlu0 %638
        %v640 = vadd.f32 %v571, %v572
        %641 = vadd.xlane.f32.xlu0 %v640
        %v642 = vpop.xlane.xlu0 %641
        %v643 = vadd.f32 %v573, %v574
        %644 = vadd.xlane.f32.xlu0 %v643
        %v645 = vpop.xlane.xlu0 %644
        %v646 = vadd.f32 %v575, %v576
        %647 = vadd.xlane.f32.xlu0 %v646
        %v648 = vpop.xlane.xlu0 %647
        %v649 = vadd.f32 %v577, %v578
        %650 = vadd.xlane.f32.xlu0 %v649
        %v651 = vpop.xlane.xlu0 %650
        %v652 = vadd.f32 %v579, %v580
        %653 = vadd.xlane.f32.xlu0 %v652
        %v654 = vpop.xlane.xlu0 %653
        %v655 = vadd.f32 %v581, %v582
        %656 = vadd.xlane.f32.xlu0 %v655
        %v657 = vpop.xlane.xlu0 %656
        %v658 = vadd.f32 %v583, %v584
        %659 = vadd.xlane.f32.xlu0 %v658
        %v660 = vpop.xlane.xlu0 %659
        %v661 = vadd.f32 %v585, %v586
        %662 = vadd.xlane.f32.xlu0 %v661
        %v663 = vpop.xlane.xlu0 %662
        %v664 = vadd.f32 %v587, %v588
        %665 = vadd.xlane.f32.xlu0 %v664
        %v666 = vpop.xlane.xlu0 %665
        %v667 = vadd.f32 %v589, %v590
        %668 = vadd.xlane.f32.xlu0 %v667
        %v669 = vpop.xlane.xlu0 %668
        %v670 = vadd.f32 %v591, %v592
        %671 = vadd.xlane.f32.xlu0 %v670
        %v672 = vpop.xlane.xlu0 %671
        %v673 = vadd.f32 %v593, %v594
        %674 = vadd.xlane.f32.xlu0 %v673
        %v675 = vpop.xlane.xlu0 %674
        %v676 = vadd.f32 %v595, %v596
        %677 = vadd.xlane.f32.xlu0 %v676
        %v678 = vpop.xlane.xlu0 %677
        %v679 = vadd.f32 %v597, %v598
        %680 = vadd.xlane.f32.xlu0 %v679
        %v681 = vpop.xlane.xlu0 %680
        %v682 = vadd.f32 %v599, %v600
        %683 = vadd.xlane.f32.xlu0 %v682
        %v684 = vpop.xlane.xlu0 %683
        %v685 = vadd.f32 %v601, %v602
        %686 = vadd.xlane.f32.xlu0 %v685
        %v687 = vpop.xlane.xlu0 %686
        %v688 = vadd.f32 %v603, %v604
        %689 = vadd.xlane.f32.xlu0 %v688
        %v690 = vpop.xlane.xlu0 %689
        %v691 = vadd.f32 %v605, %v606
        %692 = vadd.xlane.f32.xlu0 %v691
        %v693 = vpop.xlane.xlu0 %692
        %v694 = vadd.f32 %v607, %v608
        %695 = vadd.xlane.f32.xlu0 %v694
        %v696 = vpop.xlane.xlu0 %695
        %v697 = vadd.f32 %v609, %v610
        %698 = vadd.xlane.f32.xlu0 %v697
        %v699 = vpop.xlane.xlu0 %698
        %v700 = vadd.f32 %v611, %v612
        %701 = vadd.xlane.f32.xlu0 %v700
        %v702 = vpop.xlane.xlu0 %701
        %v703 = vadd.f32 %v613, %v614
        %704 = vadd.xlane.f32.xlu0 %v703
        %v705 = vpop.xlane.xlu0 %704
        %v706 = vadd.f32 %v615, %v616
        %707 = vadd.xlane.f32.xlu0 %v706
        %v708 = vpop.xlane.xlu0 %707
        %v709 = vadd.f32 %v617, %v618
        %710 = vadd.xlane.f32.xlu0 %v709
        %v711 = vpop.xlane.xlu0 %710
        %v712 = vadd.f32 %v619, %v620
        %713 = vadd.xlane.f32.xlu0 %v712
        %v714 = vpop.xlane.xlu0 %713
        %v715 = vadd.f32 %v621, %v622
        %716 = vadd.xlane.f32.xlu0 %v715
        %v717 = vpop.xlane.xlu0 %716
        %v718 = vadd.f32 %v623, %v624
        %719 = vadd.xlane.f32.xlu0 %v718
        %v720 = vpop.xlane.xlu0 %719
        %v721 = vmul.f32 %v627, %v464
        %v722 = vmul.f32 %v630, %v464
        %v723 = vmul.f32 %v633, %v464
        %v724 = vmul.f32 %v636, %v464
        %v725 = vmul.f32 %v639, %v464
        %v726 = vmul.f32 %v642, %v464
        %v727 = vmul.f32 %v645, %v464
        %v728 = vmul.f32 %v648, %v464
        %v729 = vmul.f32 %v651, %v464
        %v730 = vmul.f32 %v654, %v464
        %v731 = vmul.f32 %v657, %v464
        %v732 = vmul.f32 %v660, %v464
        %v733 = vmul.f32 %v663, %v464
        %v734 = vmul.f32 %v666, %v464
        %v735 = vmul.f32 %v669, %v464
        %v736 = vmul.f32 %v672, %v464
        %v737 = vmul.f32 %v675, %v464
        %v738 = vmul.f32 %v678, %v464
        %v739 = vmul.f32 %v681, %v464
        %v740 = vmul.f32 %v684, %v464
        %v741 = vmul.f32 %v687, %v464
        %v742 = vmul.f32 %v690, %v464
        %v743 = vmul.f32 %v693, %v464
        %v744 = vmul.f32 %v696, %v464
        %v745 = vmul.f32 %v699, %v464
        %v746 = vmul.f32 %v702, %v464
        %v747 = vmul.f32 %v705, %v464
        %v748 = vmul.f32 %v708, %v464
        %v749 = vmul.f32 %v711, %v464
        %v750 = vmul.f32 %v714, %v464
        %v751 = vmul.f32 %v717, %v464
        %v752 = vmul.f32 %v720, %v464
        %v753 = vadd.f32 %v721, 1e-05
        %v754 = vadd.f32 %v722, 1e-05
        %v755 = vadd.f32 %v723, 1e-05
        %v756 = vadd.f32 %v724, 1e-05
        %v757 = vadd.f32 %v725, 1e-05
        %v758 = vadd.f32 %v726, 1e-05
        %v759 = vadd.f32 %v727, 1e-05
        %v760 = vadd.f32 %v728, 1e-05
        %v761 = vadd.f32 %v729, 1e-05
        %v762 = vadd.f32 %v730, 1e-05
        %v763 = vadd.f32 %v731, 1e-05
        %v764 = vadd.f32 %v732, 1e-05
        %v765 = vadd.f32 %v733, 1e-05
        %v766 = vadd.f32 %v734, 1e-05
        %v767 = vadd.f32 %v735, 1e-05
        %v768 = vadd.f32 %v736, 1e-05
        %v769 = vadd.f32 %v737, 1e-05
        %v770 = vadd.f32 %v738, 1e-05
        %v771 = vadd.f32 %v739, 1e-05
        %v772 = vadd.f32 %v740, 1e-05
        %v773 = vadd.f32 %v741, 1e-05
        %v774 = vadd.f32 %v742, 1e-05
        %v775 = vadd.f32 %v743, 1e-05
        %v776 = vadd.f32 %v744, 1e-05
        %v777 = vadd.f32 %v745, 1e-05
        %v778 = vadd.f32 %v746, 1e-05
        %v779 = vadd.f32 %v747, 1e-05
        %v780 = vadd.f32 %v748, 1e-05
        %v781 = vadd.f32 %v749, 1e-05
        %v782 = vadd.f32 %v750, 1e-05
        %v783 = vadd.f32 %v751, 1e-05
        %v784 = vadd.f32 %v752, 1e-05
        %v785 = vrsqrt.pop %v753
        %v786 = vrsqrt.pop %v754
        %v787 = vrsqrt.pop %v755
        %v788 = vrsqrt.pop %v756
        %v789 = vrsqrt.pop %v757
        %v790 = vrsqrt.pop %v758
        %v791 = vrsqrt.pop %v759
        %v792 = vrsqrt.pop %v760
        %v793 = vrsqrt.pop %v761
        %v794 = vrsqrt.pop %v762
        %v795 = vrsqrt.pop %v763
        %v796 = vrsqrt.pop %v764
        %v797 = vrsqrt.pop %v765
        %v798 = vrsqrt.pop %v766
        %v799 = vrsqrt.pop %v767
        %v800 = vrsqrt.pop %v768
        %v801 = vrsqrt.pop %v769
        %v802 = vrsqrt.pop %v770
        %v803 = vrsqrt.pop %v771
        %v804 = vrsqrt.pop %v772
        %v805 = vrsqrt.pop %v773
        %v806 = vrsqrt.pop %v774
        %v807 = vrsqrt.pop %v775
        %v808 = vrsqrt.pop %v776
        %v809 = vrsqrt.pop %v777
        %v810 = vrsqrt.pop %v778
        %v811 = vrsqrt.pop %v779
        %v812 = vrsqrt.pop %v780
        %v813 = vrsqrt.pop %v781
        %v814 = vrsqrt.pop %v782
        %v815 = vrsqrt.pop %v783
        %v816 = vrsqrt.pop %v784
        %v817 = vmul.f32 %v497, %v785
        %v818 = vmul.f32 %v498, %v785
        %v819 = vmul.f32 %v499, %v786
        %v820 = vmul.f32 %v500, %v786
        %v821 = vmul.f32 %v501, %v787
        %v822 = vmul.f32 %v502, %v787
        %v823 = vmul.f32 %v503, %v788
        %v824 = vmul.f32 %v504, %v788
        %v825 = vmul.f32 %v505, %v789
        %v826 = vmul.f32 %v506, %v789
        %v827 = vmul.f32 %v507, %v790
        %v828 = vmul.f32 %v508, %v790
        %v829 = vmul.f32 %v509, %v791
        %v830 = vmul.f32 %v510, %v791
        %v831 = vmul.f32 %v511, %v792
        %v832 = vmul.f32 %v512, %v792
        %v833 = vmul.f32 %v513, %v793
        %v834 = vmul.f32 %v514, %v793
        %v835 = vmul.f32 %v515, %v794
        %v836 = vmul.f32 %v516, %v794
        %v837 = vmul.f32 %v517, %v795
        %v838 = vmul.f32 %v518, %v795
        %v839 = vmul.f32 %v519, %v796
        %v840 = vmul.f32 %v520, %v796
        %v841 = vmul.f32 %v521, %v797
        %v842 = vmul.f32 %v522, %v797
        %v843 = vmul.f32 %v523, %v798
        %v844 = vmul.f32 %v524, %v798
        %v845 = vmul.f32 %v525, %v799
        %v846 = vmul.f32 %v526, %v799
        %v847 = vmul.f32 %v527, %v800
        %v848 = vmul.f32 %v528, %v800
        %v849 = vmul.f32 %v529, %v801
        %v850 = vmul.f32 %v530, %v801
        %v851 = vmul.f32 %v531, %v802
        %v852 = vmul.f32 %v532, %v802
        %v853 = vmul.f32 %v533, %v803
        %v854 = vmul.f32 %v534, %v803
        %v855 = vmul.f32 %v535, %v804
        %v856 = vmul.f32 %v536, %v804
        %v857 = vmul.f32 %v537, %v805
        %v858 = vmul.f32 %v538, %v805
        %v859 = vmul.f32 %v539, %v806
        %v860 = vmul.f32 %v540, %v806
        %v861 = vmul.f32 %v541, %v807
        %v862 = vmul.f32 %v542, %v807
        %v863 = vmul.f32 %v543, %v808
        %v864 = vmul.f32 %v544, %v808
        %v865 = vmul.f32 %v545, %v809
        %v866 = vmul.f32 %v546, %v809
        %v867 = vmul.f32 %v547, %v810
        %v868 = vmul.f32 %v548, %v810
        %v869 = vmul.f32 %v549, %v811
        %v870 = vmul.f32 %v550, %v811
        %v871 = vmul.f32 %v551, %v812
        %v872 = vmul.f32 %v552, %v812
        %v873 = vmul.f32 %v553, %v813
        %v874 = vmul.f32 %v554, %v813
        %v875 = vmul.f32 %v555, %v814
        %v876 = vmul.f32 %v556, %v814
        %v877 = vmul.f32 %v557, %v815
        %v878 = vmul.f32 %v558, %v815
        %v879 = vmul.f32 %v559, %v816
        %v880 = vmul.f32 %v560, %v816
        %v881 = vld [vmem:[%s1] sm:$0x3]
        %v883 = vlaneseq
        %v884 = vshrl.u32 %v883, 7
        %v885 = vsub.s32 0, %v884
        %v886 = vrot.slane %v881, %v885
        %v887 = vlaneseq
        %v888 = vshrl.u32 %v887, 7
        %v889 = vsub.s32 1, %v888
        %v890 = vrot.slane %v881, %v889
        %v893 = vmul.f32 %v817, %v886
        %v894 = vmul.f32 %v818, %v890
        %v895 = vmul.f32 %v819, %v886
        %v896 = vmul.f32 %v820, %v890
        %v897 = vmul.f32 %v821, %v886
        %v898 = vmul.f32 %v822, %v890
        %v899 = vmul.f32 %v823, %v886
        %v900 = vmul.f32 %v824, %v890
        %v901 = vmul.f32 %v825, %v886
        %v902 = vmul.f32 %v826, %v890
        %v903 = vmul.f32 %v827, %v886
        %v904 = vmul.f32 %v828, %v890
        %v905 = vmul.f32 %v829, %v886
        %v906 = vmul.f32 %v830, %v890
        %v907 = vmul.f32 %v831, %v886
        %v908 = vmul.f32 %v832, %v890
        %v909 = vmul.f32 %v833, %v886
        %v910 = vmul.f32 %v834, %v890
        %v911 = vmul.f32 %v835, %v886
        %v912 = vmul.f32 %v836, %v890
        %v913 = vmul.f32 %v837, %v886
        %v914 = vmul.f32 %v838, %v890
        %v915 = vmul.f32 %v839, %v886
        %v916 = vmul.f32 %v840, %v890
        %v917 = vmul.f32 %v841, %v886
        %v918 = vmul.f32 %v842, %v890
        %v919 = vmul.f32 %v843, %v886
        %v920 = vmul.f32 %v844, %v890
        %v921 = vmul.f32 %v845, %v886
        %v922 = vmul.f32 %v846, %v890
        %v923 = vmul.f32 %v847, %v886
        %v924 = vmul.f32 %v848, %v890
        %v925 = vmul.f32 %v849, %v886
        %v926 = vmul.f32 %v850, %v890
        %v927 = vmul.f32 %v851, %v886
        %v928 = vmul.f32 %v852, %v890
        %v929 = vmul.f32 %v853, %v886
        %v930 = vmul.f32 %v854, %v890
        %v931 = vmul.f32 %v855, %v886
        %v932 = vmul.f32 %v856, %v890
        %v933 = vmul.f32 %v857, %v886
        %v934 = vmul.f32 %v858, %v890
        %v935 = vmul.f32 %v859, %v886
        %v936 = vmul.f32 %v860, %v890
        %v937 = vmul.f32 %v861, %v886
        %v938 = vmul.f32 %v862, %v890
        %v939 = vmul.f32 %v863, %v886
        %v940 = vmul.f32 %v864, %v890
        %v941 = vmul.f32 %v865, %v886
        %v942 = vmul.f32 %v866, %v890
        %v943 = vmul.f32 %v867, %v886
        %v944 = vmul.f32 %v868, %v890
        %v945 = vmul.f32 %v869, %v886
        %v946 = vmul.f32 %v870, %v890
        %v947 = vmul.f32 %v871, %v886
        %v948 = vmul.f32 %v872, %v890
        %v949 = vmul.f32 %v873, %v886
        %v950 = vmul.f32 %v874, %v890
        %v951 = vmul.f32 %v875, %v886
        %v952 = vmul.f32 %v876, %v890
        %v953 = vmul.f32 %v877, %v886
        %v954 = vmul.f32 %v878, %v890
        %v955 = vmul.f32 %v879, %v886
        %v956 = vmul.f32 %v880, %v890
        %v957 = vld [vmem:[%s2] sm:$0x3]
        %v959 = vlaneseq
        %v960 = vshrl.u32 %v959, 7
        %v961 = vsub.s32 0, %v960
        %v962 = vrot.slane %v957, %v961
        %v963 = vlaneseq
        %v964 = vshrl.u32 %v963, 7
        %v965 = vsub.s32 1, %v964
        %v966 = vrot.slane %v957, %v965
        %v969 = vadd.f32 %v893, %v962
        %v970 = vadd.f32 %v894, %v966
        %v971 = vadd.f32 %v895, %v962
        %v972 = vadd.f32 %v896, %v966
        %v973 = vadd.f32 %v897, %v962
        %v974 = vadd.f32 %v898, %v966
        %v975 = vadd.f32 %v899, %v962
        %v976 = vadd.f32 %v900, %v966
        %v977 = vadd.f32 %v901, %v962
        %v978 = vadd.f32 %v902, %v966
        %v979 = vadd.f32 %v903, %v962
        %v980 = vadd.f32 %v904, %v966
        %v981 = vadd.f32 %v905, %v962
        %v982 = vadd.f32 %v906, %v966
        %v983 = vadd.f32 %v907, %v962
        %v984 = vadd.f32 %v908, %v966
        %v985 = vadd.f32 %v909, %v962
        %v986 = vadd.f32 %v910, %v966
        %v987 = vadd.f32 %v911, %v962
        %v988 = vadd.f32 %v912, %v966
        %v989 = vadd.f32 %v913, %v962
        %v990 = vadd.f32 %v914, %v966
        %v991 = vadd.f32 %v915, %v962
        %v992 = vadd.f32 %v916, %v966
        %v993 = vadd.f32 %v917, %v962
        %v994 = vadd.f32 %v918, %v966
        %v995 = vadd.f32 %v919, %v962
        %v996 = vadd.f32 %v920, %v966
        %v997 = vadd.f32 %v921, %v962
        %v998 = vadd.f32 %v922, %v966
        %v999 = vadd.f32 %v923, %v962
        %v1000 = vadd.f32 %v924, %v966
        %v1001 = vadd.f32 %v925, %v962
        %v1002 = vadd.f32 %v926, %v966
        %v1003 = vadd.f32 %v927, %v962
        %v1004 = vadd.f32 %v928, %v966
        %v1005 = vadd.f32 %v929, %v962
        %v1006 = vadd.f32 %v930, %v966
        %v1007 = vadd.f32 %v931, %v962
        %v1008 = vadd.f32 %v932, %v966
        %v1009 = vadd.f32 %v933, %v962
        %v1010 = vadd.f32 %v934, %v966
        %v1011 = vadd.f32 %v935, %v962
        %v1012 = vadd.f32 %v936, %v966
        %v1013 = vadd.f32 %v937, %v962
        %v1014 = vadd.f32 %v938, %v966
        %v1015 = vadd.f32 %v939, %v962
        %v1016 = vadd.f32 %v940, %v966
        %v1017 = vadd.f32 %v941, %v962
        %v1018 = vadd.f32 %v942, %v966
        %v1019 = vadd.f32 %v943, %v962
        %v1020 = vadd.f32 %v944, %v966
        %v1021 = vadd.f32 %v945, %v962
        %v1022 = vadd.f32 %v946, %v966
        %v1023 = vadd.f32 %v947, %v962
        %v1024 = vadd.f32 %v948, %v966
        %v1025 = vadd.f32 %v949, %v962
        %v1026 = vadd.f32 %v950, %v966
        %v1027 = vadd.f32 %v951, %v962
        %v1028 = vadd.f32 %v952, %v966
        %v1029 = vadd.f32 %v953, %v962
        %v1030 = vadd.f32 %v954, %v966
        %v1031 = vadd.f32 %v955, %v962
        %v1032 = vadd.f32 %v956, %v966
        %v1033 = vpack.c.bf16 %v971, %v969
        %v1034 = vpack.c.bf16 %v972, %v970
        %v1035 = vpack.c.bf16 %v975, %v973
        %v1036 = vpack.c.bf16 %v976, %v974
        %v1037 = vpack.c.bf16 %v979, %v977
        %v1038 = vpack.c.bf16 %v980, %v978
        %v1039 = vpack.c.bf16 %v983, %v981
        %v1040 = vpack.c.bf16 %v984, %v982
        %v1041 = vpack.c.bf16 %v987, %v985
        %v1042 = vpack.c.bf16 %v988, %v986
        %v1043 = vpack.c.bf16 %v991, %v989
        %v1044 = vpack.c.bf16 %v992, %v990
        %v1045 = vpack.c.bf16 %v995, %v993
        %v1046 = vpack.c.bf16 %v996, %v994
        %v1047 = vpack.c.bf16 %v999, %v997
        %v1048 = vpack.c.bf16 %v1000, %v998
        %v1049 = vpack.c.bf16 %v1003, %v1001
        %v1050 = vpack.c.bf16 %v1004, %v1002
        %v1051 = vpack.c.bf16 %v1007, %v1005
        %v1052 = vpack.c.bf16 %v1008, %v1006
        %v1053 = vpack.c.bf16 %v1011, %v1009
        %v1054 = vpack.c.bf16 %v1012, %v1010
        %v1055 = vpack.c.bf16 %v1015, %v1013
        %v1056 = vpack.c.bf16 %v1016, %v1014
        %v1057 = vpack.c.bf16 %v1019, %v1017
        %v1058 = vpack.c.bf16 %v1020, %v1018
        %v1059 = vpack.c.bf16 %v1023, %v1021
        %v1060 = vpack.c.bf16 %v1024, %v1022
        %v1061 = vpack.c.bf16 %v1027, %v1025
        %v1062 = vpack.c.bf16 %v1028, %v1026
        %v1063 = vpack.c.bf16 %v1031, %v1029
        %v1064 = vpack.c.bf16 %v1032, %v1030
        %v1065 = vld [vmem:[%s264] sm:$0xff]
        %v1066 = vld [vmem:[%s264 + $0x8] sm:$0xff]
        %v1067 = vld [vmem:[%s264 + $0x10] sm:$0xff]
        %v1068 = vld [vmem:[%s264 + $0x18] sm:$0xff]
        %v1069 = vld [vmem:[%s264 + $0x20] sm:$0xff]
        %v1070 = vld [vmem:[%s264 + $0x28] sm:$0xff]
        %v1071 = vld [vmem:[%s264 + $0x30] sm:$0xff]
        %v1072 = vld [vmem:[%s264 + $0x38] sm:$0xff]
        %v1073 = vld [vmem:[%s264 + $0x40] sm:$0xff]
        %v1074 = vld [vmem:[%s264 + $0x48] sm:$0xff]
        %v1075 = vld [vmem:[%s264 + $0x50] sm:$0xff]
        %v1076 = vld [vmem:[%s264 + $0x58] sm:$0xff]
        %v1077 = vld [vmem:[%s264 + $0x60] sm:$0xff]
        %v1078 = vld [vmem:[%s264 + $0x68] sm:$0xff]
        %v1079 = vld [vmem:[%s264 + $0x70] sm:$0xff]
        %v1080 = vld [vmem:[%s264 + $0x78] sm:$0xff]
        %v1081 = vld [vmem:[%s264 + $0x80] sm:$0xff]
        %v1082 = vld [vmem:[%s264 + $0x88] sm:$0xff]
        %v1083 = vld [vmem:[%s264 + $0x90] sm:$0xff]
        %v1084 = vld [vmem:[%s264 + $0x98] sm:$0xff]
        %v1085 = vld [vmem:[%s264 + $0xa0] sm:$0xff]
        %v1086 = vld [vmem:[%s264 + $0xa8] sm:$0xff]
        %v1087 = vld [vmem:[%s264 + $0xb0] sm:$0xff]
        %v1088 = vld [vmem:[%s264 + $0xb8] sm:$0xff]
        %v1089 = vld [vmem:[%s264 + $0xc0] sm:$0xff]
        %v1090 = vld [vmem:[%s264 + $0xc8] sm:$0xff]
        %v1091 = vld [vmem:[%s264 + $0xd0] sm:$0xff]
        %v1092 = vld [vmem:[%s264 + $0xd8] sm:$0xff]
        %v1093 = vld [vmem:[%s264 + $0xe0] sm:$0xff]
        %v1094 = vld [vmem:[%s264 + $0xe8] sm:$0xff]
        %v1095 = vld [vmem:[%s264 + $0xf0] sm:$0xff]
        %v1096 = vld [vmem:[%s264 + $0xf8] sm:$0xff]
        %v1097 = vld [vmem:[%s300] sm:$0x3]
        %v1099 = vlaneseq
        %v1100 = vshrl.u32 %v1099, 7
        %v1101 = vsub.s32 0, %v1100
        %v1102 = vrot.slane %v1097, %v1101
        %v1103 = vlaneseq
        %v1104 = vshrl.u32 %v1103, 7
        %v1105 = vsub.s32 1, %v1104
        %v1106 = vrot.slane %v1097, %v1105
        %v1141 = vunpack.c.l.b16 %v1065
        %v1142 = vunpack.c.h.b16 %v1065
        %v1143 = vunpack.c.l.b16 %v1066
        %v1144 = vunpack.c.h.b16 %v1066
        %v1145 = vunpack.c.l.b16 %v1067
        %v1146 = vunpack.c.h.b16 %v1067
        %v1147 = vunpack.c.l.b16 %v1068
        %v1148 = vunpack.c.h.b16 %v1068
        %v1149 = vunpack.c.l.b16 %v1069
        %v1150 = vunpack.c.h.b16 %v1069
        %v1151 = vunpack.c.l.b16 %v1070
        %v1152 = vunpack.c.h.b16 %v1070
        %v1153 = vunpack.c.l.b16 %v1071
        %v1154 = vunpack.c.h.b16 %v1071
        %v1155 = vunpack.c.l.b16 %v1072
        %v1156 = vunpack.c.h.b16 %v1072
        %v1157 = vunpack.c.l.b16 %v1073
        %v1158 = vunpack.c.h.b16 %v1073
        %v1159 = vunpack.c.l.b16 %v1074
        %v1160 = vunpack.c.h.b16 %v1074
        %v1161 = vunpack.c.l.b16 %v1075
        %v1162 = vunpack.c.h.b16 %v1075
        %v1163 = vunpack.c.l.b16 %v1076
        %v1164 = vunpack.c.h.b16 %v1076
        %v1165 = vunpack.c.l.b16 %v1077
        %v1166 = vunpack.c.h.b16 %v1077
        %v1167 = vunpack.c.l.b16 %v1078
        %v1168 = vunpack.c.h.b16 %v1078
        %v1169 = vunpack.c.l.b16 %v1079
        %v1170 = vunpack.c.h.b16 %v1079
        %v1171 = vunpack.c.l.b16 %v1080
        %v1172 = vunpack.c.h.b16 %v1080
        %v1173 = vunpack.c.l.b16 %v1081
        %v1174 = vunpack.c.h.b16 %v1081
        %v1175 = vunpack.c.l.b16 %v1082
        %v1176 = vunpack.c.h.b16 %v1082
        %v1177 = vunpack.c.l.b16 %v1083
        %v1178 = vunpack.c.h.b16 %v1083
        %v1179 = vunpack.c.l.b16 %v1084
        %v1180 = vunpack.c.h.b16 %v1084
        %v1181 = vunpack.c.l.b16 %v1085
        %v1182 = vunpack.c.h.b16 %v1085
        %v1183 = vunpack.c.l.b16 %v1086
        %v1184 = vunpack.c.h.b16 %v1086
        %v1185 = vunpack.c.l.b16 %v1087
        %v1186 = vunpack.c.h.b16 %v1087
        %v1187 = vunpack.c.l.b16 %v1088
        %v1188 = vunpack.c.h.b16 %v1088
        %v1189 = vunpack.c.l.b16 %v1089
        %v1190 = vunpack.c.h.b16 %v1089
        %v1191 = vunpack.c.l.b16 %v1090
        %v1192 = vunpack.c.h.b16 %v1090
        %v1193 = vunpack.c.l.b16 %v1091
        %v1194 = vunpack.c.h.b16 %v1091
        %v1195 = vunpack.c.l.b16 %v1092
        %v1196 = vunpack.c.h.b16 %v1092
        %v1197 = vunpack.c.l.b16 %v1093
        %v1198 = vunpack.c.h.b16 %v1093
        %v1199 = vunpack.c.l.b16 %v1094
        %v1200 = vunpack.c.h.b16 %v1094
        %v1201 = vunpack.c.l.b16 %v1095
        %v1202 = vunpack.c.h.b16 %v1095
        %v1203 = vunpack.c.l.b16 %v1096
        %v1204 = vunpack.c.h.b16 %v1096
        %v1205 = vpack.c.b16 %v1143, %v1141
        %v1206 = vpack.c.b16 %v1144, %v1142
        %v1207 = vpack.c.b16 %v1147, %v1145
        %v1208 = vpack.c.b16 %v1148, %v1146
        %v1209 = vpack.c.b16 %v1151, %v1149
        %v1210 = vpack.c.b16 %v1152, %v1150
        %v1211 = vpack.c.b16 %v1155, %v1153
        %v1212 = vpack.c.b16 %v1156, %v1154
        %v1213 = vpack.c.b16 %v1159, %v1157
        %v1214 = vpack.c.b16 %v1160, %v1158
        %v1215 = vpack.c.b16 %v1163, %v1161
        %v1216 = vpack.c.b16 %v1164, %v1162
        %v1217 = vpack.c.b16 %v1167, %v1165
        %v1218 = vpack.c.b16 %v1168, %v1166
        %v1219 = vpack.c.b16 %v1171, %v1169
        %v1220 = vpack.c.b16 %v1172, %v1170
        %v1221 = vpack.c.b16 %v1175, %v1173
        %v1222 = vpack.c.b16 %v1176, %v1174
        %v1223 = vpack.c.b16 %v1179, %v1177
        %v1224 = vpack.c.b16 %v1180, %v1178
        %v1225 = vpack.c.b16 %v1183, %v1181
        %v1226 = vpack.c.b16 %v1184, %v1182
        %v1227 = vpack.c.b16 %v1187, %v1185
        %v1228 = vpack.c.b16 %v1188, %v1186
        %v1229 = vpack.c.b16 %v1191, %v1189
        %v1230 = vpack.c.b16 %v1192, %v1190
        %v1231 = vpack.c.b16 %v1195, %v1193
        %v1232 = vpack.c.b16 %v1196, %v1194
        %v1233 = vpack.c.b16 %v1199, %v1197
        %v1234 = vpack.c.b16 %v1200, %v1198
        %v1235 = vpack.c.b16 %v1203, %v1201
        %v1236 = vpack.c.b16 %v1204, %v1202
        %1269 = vmatprep.subr.bf16.mxu0 %v1206
        %1270 = vmatpush1.bf16.msra.mxu0 %v1205
        %1271 = vmatprep.subr.bf16.mxu0 %v1208
        %1272 = vmatpush1.bf16.msra.mxu0 %v1207
        %1273 = vmatprep.subr.bf16.mxu0 %v1210
        %1274 = vmatpush1.bf16.msra.mxu0 %v1209
        %1275 = vmatprep.subr.bf16.mxu0 %v1212
        %1276 = vmatpush1.bf16.msra.mxu0 %v1211
        %1277 = vmatprep.subr.bf16.mxu0 %v1214
        %1278 = vmatpush1.bf16.msra.mxu0 %v1213
        %1279 = vmatprep.subr.bf16.mxu0 %v1216
        %1280 = vmatpush1.bf16.msra.mxu0 %v1215
        %1281 = vmatprep.subr.bf16.mxu0 %v1218
        %1282 = vmatpush1.bf16.msra.mxu0 %v1217
        %1283 = vmatprep.subr.bf16.mxu0 %v1220
        %1284 = vmatpush1.bf16.msra.mxu0 %v1219
        %1285 = vmatprep.subr.bf16.mxu0 %v1222
        %1286 = vmatpush1.bf16.msra.mxu0 %v1221
        %1287 = vmatprep.subr.bf16.mxu0 %v1224
        %1288 = vmatpush1.bf16.msra.mxu0 %v1223
        %1289 = vmatprep.subr.bf16.mxu0 %v1226
        %1290 = vmatpush1.bf16.msra.mxu0 %v1225
        %1291 = vmatprep.subr.bf16.mxu0 %v1228
        %1292 = vmatpush1.bf16.msra.mxu0 %v1227
        %1293 = vmatprep.subr.bf16.mxu0 %v1230
        %1294 = vmatpush1.bf16.msra.mxu0 %v1229
        %1295 = vmatprep.subr.bf16.mxu0 %v1232
        %1296 = vmatpush1.bf16.msra.mxu0 %v1231
        %1297 = vmatprep.subr.bf16.mxu0 %v1234
        %1298 = vmatpush1.bf16.msra.mxu0 %v1233
        %1299 = vmatprep.subr.bf16.mxu0 %v1236
        %1300 = vmatpush1.bf16.msra.mxu0 %v1235
        %1301 = vmatprep.mubr.bf16.mxu0 %v1034
        %1302 = vmatmul.mubr.bf16.gmra.mrb[0].mxu0 %v1033
        %v1303 = vpop.f32.mrb[0].mxu0
        %v1304 = vadd.f32 %v1102, %v1303
        %v1305 = vpop.f32.mrb[0].mxu0
        %v1306 = vadd.f32 %v1106, %v1305
        %v1307 = vpop.f32.mrb[0].mxu0
        %v1308 = vadd.f32 %v1102, %v1307
        %v1309 = vpop.f32.mrb[0].mxu0
        %v1310 = vadd.f32 %v1106, %v1309
        %1311 = vmatprep.mubr.bf16.mxu0 %v1036
        %1312 = vmatmul.mubr.bf16.gmra.mrb[0].mxu0 %v1035
        %v1313 = vpop.f32.mrb[0].mxu0
        %v1314 = vadd.f32 %v1102, %v1313
        %v1315 = vpop.f32.mrb[0].mxu0
        %v1316 = vadd.f32 %v1106, %v1315
        %v1317 = vpop.f32.mrb[0].mxu0
        %v1318 = vadd.f32 %v1102, %v1317
        %v1319 = vpop.f32.mrb[0].mxu0
        %v1320 = vadd.f32 %v1106, %v1319
        %1321 = vmatprep.mubr.bf16.mxu0 %v1038
        %1322 = vmatmul.mubr.bf16.gmra.mrb[0].mxu0 %v1037
        %v1323 = vpop.f32.mrb[0].mxu0
        %v1324 = vadd.f32 %v1102, %v1323
        %v1325 = vpop.f32.mrb[0].mxu0
        %v1326 = vadd.f32 %v1106, %v1325
        %v1327 = vpop.f32.mrb[0].mxu0
        %v1328 = vadd.f32 %v1102, %v1327
        %v1329 = vpop.f32.mrb[0].mxu0
        %v1330 = vadd.f32 %v1106, %v1329
        %1331 = vmatprep.mubr.bf16.mxu0 %v1040
        %1332 = vmatmul.mubr.bf16.gmra.mrb[0].mxu0 %v1039
        %v1333 = vpop.f32.mrb[0].mxu0
        %v1334 = vadd.f32 %v1102, %v1333
        %v1335 = vpop.f32.mrb[0].mxu0
        %v1336 = vadd.f32 %v1106, %v1335
        %v1337 = vpop.f32.mrb[0].mxu0
        %v1338 = vadd.f32 %v1102, %v1337
        %v1339 = vpop.f32.mrb[0].mxu0
        %v1340 = vadd.f32 %v1106, %v1339
        %1341 = vmatprep.mubr.bf16.mxu0 %v1042
        %1342 = vmatmul.mubr.bf16.gmra.mrb[0].mxu0 %v1041
        %v1343 = vpop.f32.mrb[0].mxu0
        %v1344 = vadd.f32 %v1102, %v1343
        %v1345 = vpop.f32.mrb[0].mxu0
        %v1346 = vadd.f32 %v1106, %v1345
        %v1347 = vpop.f32.mrb[0].mxu0
        %v1348 = vadd.f32 %v1102, %v1347
        %v1349 = vpop.f32.mrb[0].mxu0
        %v1350 = vadd.f32 %v1106, %v1349
        %1351 = vmatprep.mubr.bf16.mxu0 %v1044
        %1352 = vmatmul.mubr.bf16.gmra.mrb[0].mxu0 %v1043
        %v1353 = vpop.f32.mrb[0].mxu0
        %v1354 = vadd.f32 %v1102, %v1353
        %v1355 = vpop.f32.mrb[0].mxu0
        %v1356 = vadd.f32 %v1106, %v1355
        %v1357 = vpop.f32.mrb[0].mxu0
        %v1358 = vadd.f32 %v1102, %v1357
        %v1359 = vpop.f32.mrb[0].mxu0
        %v1360 = vadd.f32 %v1106, %v1359
        %1361 = vmatprep.mubr.bf16.mxu0 %v1046
        %1362 = vmatmul.mubr.bf16.gmra.mrb[0].mxu0 %v1045
        %v1363 = vpop.f32.mrb[0].mxu0
        %v1364 = vadd.f32 %v1102, %v1363
        %v1365 = vpop.f32.mrb[0].mxu0
        %v1366 = vadd.f32 %v1106, %v1365
        %v1367 = vpop.f32.mrb[0].mxu0
        %v1368 = vadd.f32 %v1102, %v1367
        %v1369 = vpop.f32.mrb[0].mxu0
        %v1370 = vadd.f32 %v1106, %v1369
        %1371 = vmatprep.mubr.bf16.mxu0 %v1048
        %1372 = vmatmul.mubr.bf16.gmra.mrb[0].mxu0 %v1047
        %v1373 = vpop.f32.mrb[0].mxu0
        %v1374 = vadd.f32 %v1102, %v1373
        %v1375 = vpop.f32.mrb[0].mxu0
        %v1376 = vadd.f32 %v1106, %v1375
        %v1377 = vpop.f32.mrb[0].mxu0
        %v1378 = vadd.f32 %v1102, %v1377
        %v1379 = vpop.f32.mrb[0].mxu0
        %v1380 = vadd.f32 %v1106, %v1379
        %1381 = vmatprep.mubr.bf16.mxu0 %v1050
        %1382 = vmatmul.mubr.bf16.gmra.mrb[0].mxu0 %v1049
        %v1383 = vpop.f32.mrb[0].mxu0
        %v1384 = vadd.f32 %v1102, %v1383
        %v1385 = vpop.f32.mrb[0].mxu0
        %v1386 = vadd.f32 %v1106, %v1385
        %v1387 = vpop.f32.mrb[0].mxu0
        %v1388 = vadd.f32 %v1102, %v1387
        %v1389 = vpop.f32.mrb[0].mxu0
        %v1390 = vadd.f32 %v1106, %v1389
        %1391 = vmatprep.mubr.bf16.mxu0 %v1052
        %1392 = vmatmul.mubr.bf16.gmra.mrb[0].mxu0 %v1051
        %v1393 = vpop.f32.mrb[0].mxu0
        %v1394 = vadd.f32 %v1102, %v1393
        %v1395 = vpop.f32.mrb[0].mxu0
        %v1396 = vadd.f32 %v1106, %v1395
        %v1397 = vpop.f32.mrb[0].mxu0
        %v1398 = vadd.f32 %v1102, %v1397
        %v1399 = vpop.f32.mrb[0].mxu0
        %v1400 = vadd.f32 %v1106, %v1399
        %1401 = vmatprep.mubr.bf16.mxu0 %v1054
        %1402 = vmatmul.mubr.bf16.gmra.mrb[0].mxu0 %v1053
        %v1403 = vpop.f32.mrb[0].mxu0
        %v1404 = vadd.f32 %v1102, %v1403
        %v1405 = vpop.f32.mrb[0].mxu0
        %v1406 = vadd.f32 %v1106, %v1405
        %v1407 = vpop.f32.mrb[0].mxu0
        %v1408 = vadd.f32 %v1102, %v1407
        %v1409 = vpop.f32.mrb[0].mxu0
        %v1410 = vadd.f32 %v1106, %v1409
        %1411 = vmatprep.mubr.bf16.mxu0 %v1056
        %1412 = vmatmul.mubr.bf16.gmra.mrb[0].mxu0 %v1055
        %v1413 = vpop.f32.mrb[0].mxu0
        %v1414 = vadd.f32 %v1102, %v1413
        %v1415 = vpop.f32.mrb[0].mxu0
        %v1416 = vadd.f32 %v1106, %v1415
        %v1417 = vpop.f32.mrb[0].mxu0
        %v1418 = vadd.f32 %v1102, %v1417
        %v1419 = vpop.f32.mrb[0].mxu0
        %v1420 = vadd.f32 %v1106, %v1419
        %1421 = vmatprep.mubr.bf16.mxu0 %v1058
        %1422 = vmatmul.mubr.bf16.gmra.mrb[0].mxu0 %v1057
        %v1423 = vpop.f32.mrb[0].mxu0
        %v1424 = vadd.f32 %v1102, %v1423
        %v1425 = vpop.f32.mrb[0].mxu0
        %v1426 = vadd.f32 %v1106, %v1425
        %v1427 = vpop.f32.mrb[0].mxu0
        %v1428 = vadd.f32 %v1102, %v1427
        %v1429 = vpop.f32.mrb[0].mxu0
        %v1430 = vadd.f32 %v1106, %v1429
        %1431 = vmatprep.mubr.bf16.mxu0 %v1060
        %1432 = vmatmul.mubr.bf16.gmra.mrb[0].mxu0 %v1059
        %v1433 = vpop.f32.mrb[0].mxu0
        %v1434 = vadd.f32 %v1102, %v1433
        %v1435 = vpop.f32.mrb[0].mxu0
        %v1436 = vadd.f32 %v1106, %v1435
        %v1437 = vpop.f32.mrb[0].mxu0
        %v1438 = vadd.f32 %v1102, %v1437
        %v1439 = vpop.f32.mrb[0].mxu0
        %v1440 = vadd.f32 %v1106, %v1439
        %1441 = vmatprep.mubr.bf16.mxu0 %v1062
        %1442 = vmatmul.mubr.bf16.gmra.mrb[0].mxu0 %v1061
        %v1443 = vpop.f32.mrb[0].mxu0
        %v1444 = vadd.f32 %v1102, %v1443
        %v1445 = vpop.f32.mrb[0].mxu0
        %v1446 = vadd.f32 %v1106, %v1445
        %v1447 = vpop.f32.mrb[0].mxu0
        %v1448 = vadd.f32 %v1102, %v1447
        %v1449 = vpop.f32.mrb[0].mxu0
        %v1450 = vadd.f32 %v1106, %v1449
        %1451 = vmatprep.mubr.bf16.mxu0 %v1064
        %1452 = vmatmul.mubr.bf16.gmra.mrb[0].mxu0 %v1063
        %v1453 = vpop.f32.mrb[0].mxu0
        %v1454 = vadd.f32 %v1102, %v1453
        %v1455 = vpop.f32.mrb[0].mxu0
        %v1456 = vadd.f32 %v1106, %v1455
        %v1457 = vpop.f32.mrb[0].mxu0
        %v1458 = vadd.f32 %v1102, %v1457
        %v1459 = vpop.f32.mrb[0].mxu0
        %v1460 = vadd.f32 %v1106, %v1459
        %1461 = vdwg.mxu0
        %v1462 = vpack.c.bf16 %v1308, %v1304
        %v1463 = vpack.c.bf16 %v1310, %v1306
        %v1464 = vpack.c.bf16 %v1318, %v1314
        %v1465 = vpack.c.bf16 %v1320, %v1316
        %v1466 = vpack.c.bf16 %v1328, %v1324
        %v1467 = vpack.c.bf16 %v1330, %v1326
        %v1468 = vpack.c.bf16 %v1338, %v1334
        %v1469 = vpack.c.bf16 %v1340, %v1336
        %v1470 = vpack.c.bf16 %v1348, %v1344
        %v1471 = vpack.c.bf16 %v1350, %v1346
        %v1472 = vpack.c.bf16 %v1358, %v1354
        %v1473 = vpack.c.bf16 %v1360, %v1356
        %v1474 = vpack.c.bf16 %v1368, %v1364
        %v1475 = vpack.c.bf16 %v1370, %v1366
        %v1476 = vpack.c.bf16 %v1378, %v1374
        %v1477 = vpack.c.bf16 %v1380, %v1376
        %v1478 = vpack.c.bf16 %v1388, %v1384
        %v1479 = vpack.c.bf16 %v1390, %v1386
        %v1480 = vpack.c.bf16 %v1398, %v1394
        %v1481 = vpack.c.bf16 %v1400, %v1396
        %v1482 = vpack.c.bf16 %v1408, %v1404
        %v1483 = vpack.c.bf16 %v1410, %v1406
        %v1484 = vpack.c.bf16 %v1418, %v1414
        %v1485 = vpack.c.bf16 %v1420, %v1416
        %v1486 = vpack.c.bf16 %v1428, %v1424
        %v1487 = vpack.c.bf16 %v1430, %v1426
        %v1488 = vpack.c.bf16 %v1438, %v1434
        %v1489 = vpack.c.bf16 %v1440, %v1436
        %v1490 = vpack.c.bf16 %v1448, %v1444
        %v1491 = vpack.c.bf16 %v1450, %v1446
        %v1492 = vpack.c.bf16 %v1458, %v1454
        %v1493 = vpack.c.bf16 %v1460, %v1456
        %v1526 = vunpack.c.l.b16 %v1462
        %v1527 = vunpack.c.l.b16 %v1463
        %v1528 = vunpack.c.h.b16 %v1462
        %v1529 = vunpack.c.h.b16 %v1463
        %v1530 = vunpack.c.l.b16 %v1464
        %v1531 = vunpack.c.l.b16 %v1465
        %v1532 = vunpack.c.h.b16 %v1464
        %v1533 = vunpack.c.h.b16 %v1465
        %v1534 = vunpack.c.l.b16 %v1466
        %v1535 = vunpack.c.l.b16 %v1467
        %v1536 = vunpack.c.h.b16 %v1466
        %v1537 = vunpack.c.h.b16 %v1467
        %v1538 = vunpack.c.l.b16 %v1468
        %v1539 = vunpack.c.l.b16 %v1469
        %v1540 = vunpack.c.h.b16 %v1468
        %v1541 = vunpack.c.h.b16 %v1469
        %v1542 = vunpack.c.l.b16 %v1470
        %v1543 = vunpack.c.l.b16 %v1471
        %v1544 = vunpack.c.h.b16 %v1470
        %v1545 = vunpack.c.h.b16 %v1471
        %v1546 = vunpack.c.l.b16 %v1472
        %v1547 = vunpack.c.l.b16 %v1473
        %v1548 = vunpack.c.h.b16 %v1472
        %v1549 = vunpack.c.h.b16 %v1473
        %v1550 = vunpack.c.l.b16 %v1474
        %v1551 = vunpack.c.l.b16 %v1475
        %v1552 = vunpack.c.h.b16 %v1474
        %v1553 = vunpack.c.h.b16 %v1475
        %v1554 = vunpack.c.l.b16 %v1476
        %v1555 = vunpack.c.l.b16 %v1477
        %v1556 = vunpack.c.h.b16 %v1476
        %v1557 = vunpack.c.h.b16 %v1477
        %v1558 = vunpack.c.l.b16 %v1478
        %v1559 = vunpack.c.l.b16 %v1479
        %v1560 = vunpack.c.h.b16 %v1478
        %v1561 = vunpack.c.h.b16 %v1479
        %v1562 = vunpack.c.l.b16 %v1480
        %v1563 = vunpack.c.l.b16 %v1481
        %v1564 = vunpack.c.h.b16 %v1480
        %v1565 = vunpack.c.h.b16 %v1481
        %v1566 = vunpack.c.l.b16 %v1482
        %v1567 = vunpack.c.l.b16 %v1483
        %v1568 = vunpack.c.h.b16 %v1482
        %v1569 = vunpack.c.h.b16 %v1483
        %v1570 = vunpack.c.l.b16 %v1484
        %v1571 = vunpack.c.l.b16 %v1485
        %v1572 = vunpack.c.h.b16 %v1484
        %v1573 = vunpack.c.h.b16 %v1485
        %v1574 = vunpack.c.l.b16 %v1486
        %v1575 = vunpack.c.l.b16 %v1487
        %v1576 = vunpack.c.h.b16 %v1486
        %v1577 = vunpack.c.h.b16 %v1487
        %v1578 = vunpack.c.l.b16 %v1488
        %v1579 = vunpack.c.l.b16 %v1489
        %v1580 = vunpack.c.h.b16 %v1488
        %v1581 = vunpack.c.h.b16 %v1489
        %v1582 = vunpack.c.l.b16 %v1490
        %v1583 = vunpack.c.l.b16 %v1491
        %v1584 = vunpack.c.h.b16 %v1490
        %v1585 = vunpack.c.h.b16 %v1491
        %v1586 = vunpack.c.l.b16 %v1492
        %v1587 = vunpack.c.l.b16 %v1493
        %v1588 = vunpack.c.h.b16 %v1492
        %v1589 = vunpack.c.h.b16 %v1493
        %v1590 = vpack.c.b16 %v1527, %v1526
        %v1591 = vpack.c.b16 %v1529, %v1528
        %v1592 = vpack.c.b16 %v1531, %v1530
        %v1593 = vpack.c.b16 %v1533, %v1532
        %v1594 = vpack.c.b16 %v1535, %v1534
        %v1595 = vpack.c.b16 %v1537, %v1536
        %v1596 = vpack.c.b16 %v1539, %v1538
        %v1597 = vpack.c.b16 %v1541, %v1540
        %v1598 = vpack.c.b16 %v1543, %v1542
        %v1599 = vpack.c.b16 %v1545, %v1544
        %v1600 = vpack.c.b16 %v1547, %v1546
        %v1601 = vpack.c.b16 %v1549, %v1548
        %v1602 = vpack.c.b16 %v1551, %v1550
        %v1603 = vpack.c.b16 %v1553, %v1552
        %v1604 = vpack.c.b16 %v1555, %v1554
        %v1605 = vpack.c.b16 %v1557, %v1556
        %v1606 = vpack.c.b16 %v1559, %v1558
        %v1607 = vpack.c.b16 %v1561, %v1560
        %v1608 = vpack.c.b16 %v1563, %v1562
        %v1609 = vpack.c.b16 %v1565, %v1564
        %v1610 = vpack.c.b16 %v1567, %v1566
        %v1611 = vpack.c.b16 %v1569, %v1568
        %v1612 = vpack.c.b16 %v1571, %v1570
        %v1613 = vpack.c.b16 %v1573, %v1572
        %v1614 = vpack.c.b16 %v1575, %v1574
        %v1615 = vpack.c.b16 %v1577, %v1576
        %v1616 = vpack.c.b16 %v1579, %v1578
        %v1617 = vpack.c.b16 %v1581, %v1580
        %v1618 = vpack.c.b16 %v1583, %v1582
        %v1619 = vpack.c.b16 %v1585, %v1584
        %v1620 = vpack.c.b16 %v1587, %v1586
        %v1621 = vpack.c.b16 %v1589, %v1588
        %1654 = vst [vmem:[%s294] sm:$0xff] %v1590
        %1655 = vst [vmem:[%s294 + $0x8] sm:$0xff] %v1591
        %1656 = vst [vmem:[%s294 + $0x10] sm:$0xff] %v1592
        %1657 = vst [vmem:[%s294 + $0x18] sm:$0xff] %v1593
        %1658 = vst [vmem:[%s294 + $0x20] sm:$0xff] %v1594
        %1659 = vst [vmem:[%s294 + $0x28] sm:$0xff] %v1595
        %1660 = vst [vmem:[%s294 + $0x30] sm:$0xff] %v1596
        %1661 = vst [vmem:[%s294 + $0x38] sm:$0xff] %v1597
        %1662 = vst [vmem:[%s294 + $0x40] sm:$0xff] %v1598
        %1663 = vst [vmem:[%s294 + $0x48] sm:$0xff] %v1599
        %1664 = vst [vmem:[%s294 + $0x50] sm:$0xff] %v1600
        %1665 = vst [vmem:[%s294 + $0x58] sm:$0xff] %v1601
        %1666 = vst [vmem:[%s294 + $0x60] sm:$0xff] %v1602
        %1667 = vst [vmem:[%s294 + $0x68] sm:$0xff] %v1603
        %1668 = vst [vmem:[%s294 + $0x70] sm:$0xff] %v1604
        %1669 = vst [vmem:[%s294 + $0x78] sm:$0xff] %v1605
        %1670 = vst [vmem:[%s294 + $0x80] sm:$0xff] %v1606
        %1671 = vst [vmem:[%s294 + $0x88] sm:$0xff] %v1607
        %1672 = vst [vmem:[%s294 + $0x90] sm:$0xff] %v1608
        %1673 = vst [vmem:[%s294 + $0x98] sm:$0xff] %v1609
        %1674 = vst [vmem:[%s294 + $0xa0] sm:$0xff] %v1610
        %1675 = vst [vmem:[%s294 + $0xa8] sm:$0xff] %v1611
        %1676 = vst [vmem:[%s294 + $0xb0] sm:$0xff] %v1612
        %1677 = vst [vmem:[%s294 + $0xb8] sm:$0xff] %v1613
        %1678 = vst [vmem:[%s294 + $0xc0] sm:$0xff] %v1614
        %1679 = vst [vmem:[%s294 + $0xc8] sm:$0xff] %v1615
        %1680 = vst [vmem:[%s294 + $0xd0] sm:$0xff] %v1616
        %1681 = vst [vmem:[%s294 + $0xd8] sm:$0xff] %v1617
        %1682 = vst [vmem:[%s294 + $0xe0] sm:$0xff] %v1618
        %1683 = vst [vmem:[%s294 + $0xe8] sm:$0xff] %v1619
        %1684 = vst [vmem:[%s294 + $0xf0] sm:$0xff] %v1620
        %1685 = vst [vmem:[%s294 + $0xf8] sm:$0xff] %v1621
        %s1686 = sand.u32 %s165, 1
        %s1687 = scalar_lea.sflag [#allocation4], %s1686
        %s1688 = sand.u32 %s165, 1
        %s1689 = smul.addr %s1688, 256
        %s1690 = scalar_lea.vmem [#allocation7], %s1689
        // Predicated region
        $region49: #{tpu_custom_call.1} parent=39 // pred_check
          %p1691 = pneg %p175
        $region50: #{tpu_custom_call.1} parent=39 // pred_check_branch
          %1693 = sbr.rel (%p1691) target = $region52
        $region51: #{tpu_custom_call.1} parent=39 // pred_region
          %s1694 = smul.u32 32, %s27
          %s1695 = smul.u32 2, %s28
          %s1697 = ssub.s32 4096, 4096
          %1698 = vsyncadd %s1687, %s1697
          %s1699 = smul.addr %s1694, 6
          %s1700 = sadd.s32 %s1695, %s1699
          %s1701 = smul.addr %s1700, 64
          %s1702 = scalar_lea.hbm %s5, %s1701
          %s1703 = sshll.u32 %s1690, 4
          %s1704 = int_to_ptr.vmem [resolvable:$true] %s1703
          %1709 = dma.vmem_to_hbm [thread:$0]  %s1704, 4096, %s1702, %s1687, 128, 384, 8
        $region52: #{tpu_custom_call.1} parent=39 // pred_fallthru
          _
      $region40: #{tpu_custom_call.1} parent=5 // pred_fallthru
        _
      %p1710 = scmp.le.s32.totalorder 2, %s18
      // Predicated region
      $region53: #{tpu_custom_call.1} parent=5 // pred_check
        %p1711 = pneg %p1710
      $region54: #{tpu_custom_call.1} parent=5 // pred_check_branch
        %1713 = sbr.rel (%p1711) target = $region56
      $region55: #{tpu_custom_call.1} parent=5 // pred_region
        %s1714 = ssub.s32 %s18, 2
        // Predicated region
        $region57: #{tpu_custom_call.1} parent=55 // pred_check
          %p1715 = pneg %p181
        $region58: #{tpu_custom_call.1} parent=55 // pred_check_branch
          %1717 = sbr.rel (%p1715) target = $region60
        $region59: #{tpu_custom_call.1} parent=55 // pred_region
          %s1718 = sand.u32 %s166, 1
          %s1719 = scalar_lea.sflag [#allocation4], %s1718
          %s1720 = sand.u32 %s166, 1
          %s1721 = smul.addr %s1720, 256
          %s1722 = scalar_lea.vmem [#allocation7], %s1721
          %1723 = dma.done %s1719, 4096
        $region60: #{tpu_custom_call.1} parent=55 // pred_fallthru
          _
      $region56: #{tpu_custom_call.1} parent=5 // pred_fallthru
        _
    $region6: #{tpu_custom_call.1} parent=1 // loop_footer
      %s22 = sadd.s32 1, %s18
    $region7: #{tpu_custom_call.1} parent=1 // loop_footer_branch
      %17 = sbr.rel target = $region3
    $region8: #{tpu_custom_call.1} parent=1 // loop_exit
      _
    %1724 = vsyncpa [#allocation3], 1
    %s1725 = scalar_lea.sflag [#allocation3], 1
    %1726 = vsyncpa %s1725, 1
    %1727 = vsyncpa [#allocation6], 1
    %s1728 = scalar_lea.sflag [#allocation6], 1
    %1729 = vsyncpa %s1728, 1
    %1730 = vsyncpa [#allocation4], 1
    %s1731 = scalar_lea.sflag [#allocation4], 1
    %1732 = vsyncpa %s1731, 1

</llo_original>
